<compile_context>
chip_gen: v7x
topology: tpu7x:2x2x1
jax: 0.10.0
libtpu: 0.0.40
codegen_flags: <defaults>
</compile_context>

<pallas_src>
import jax
import jax.numpy as jnp
from jax.experimental import pallas as pl
from jax.experimental.pallas import tpu as pltpu

LANE = 128
MIN_TILE_B = 16      # bf16 packs 16 rows per vreg sublane group
MAX_TILE_B = 1024    # batch tile cap (perf review: 512-1024)


def _round_up(x, m):
    return (x + m - 1) // m * m


# ----------------------------------------------------------------------------
# Fused kernel: chain of L padded (128 -> 128) matmul + bias + activation.
# ----------------------------------------------------------------------------
def _make_fused_kernel(acts, z_layer):
    n_layers = len(acts)

    def kernel(x_ref, w_ref, b_ref, z_ref, o_ref):
        # h carried in bf16 between layers (the bf16 cast would happen before
        # the next MXU matmul anyway); bias/activation math stays f32.
        h = x_ref[...]                                     # (tile_b, 128) bf16
        b_all = b_ref[...]                                 # (L, 128) f32
        for l in range(n_layers):                          # unrolled at trace
            acc = jnp.dot(h, w_ref[l],
                          preferred_element_type=jnp.float32)
            acc = acc + b_all[l:l + 1, :]                  # (1,128) f32 bcast
            a = acts[l]
            if a == "relu":
                acc = jnp.maximum(acc, 0.0)
            elif a == "tanh":
                acc = jnp.tanh(acc)                        # f32 on EUP
            if l == z_layer:
                z_ref[...] = acc        # store z NOW -> frees its vregs
            if l == n_layers - 1:
                o_ref[...] = acc        # final decoder output (f32, lane-dense)
            else:
                h = acc.astype(jnp.bfloat16)

    return kernel


# ----------------------------------------------------------------------------
# Parameter construction: per-modality xavier weights, block-diagonal fusion,
# zero padding to (128, 128) tiles, stacking into slabs.
# ----------------------------------------------------------------------------
def _xavier(key, fan_in, fan_out):
    a = (6.0 / (fan_in + fan_out)) ** 0.5
    return jax.random.uniform(key, (fan_in, fan_out), jnp.float32, -a, a)


def _block_diag(mats):
    rows = sum(m.shape[0] for m in mats)
    cols = sum(m.shape[1] for m in mats)
    out = jnp.zeros((rows, cols), jnp.float32)
    r = c = 0
    for m in mats:
        out = out.at[r:r + m.shape[0], c:c + m.shape[1]].set(m)
        r += m.shape[0]
        c += m.shape[1]
    return out


def build_blend_vae_params(key, in_chanel, out_chanel, in_shared, out_shared):
    for c in in_chanel + out_chanel:
        assert c[0] == -1, "only MLP-modality encoders/decoders are supported"

    enc_dims = [c[1:] for c in in_chanel]
    dec_dims = [c[1:] for c in out_chanel]
    n_enc_l = len(enc_dims[0]) - 1
    n_dec_l = len(dec_dims[0]) - 1
    assert all(len(d) - 1 == n_enc_l for d in enc_dims), "equal encoder depth required"
    assert all(len(d) - 1 == n_dec_l for d in dec_dims), "equal decoder depth required"
    for d in dec_dims:
        assert d[-1] % 2 == 0, "decoder output dim must be even (mu/logstd split)"
    # decoder input slices must match encoder output widths (as in the module)
    assert [d[0] for d in dec_dims] == [d[-1] for d in enc_dims]
    assert in_shared[0] == sum(d[-1] for d in enc_dims)
    assert out_shared[0] == in_shared[-1]
    assert out_shared[-1] == sum(d[0] for d in dec_dims)

    layers = []   # (W (in,out) f32, b (out,) f32, act)

    # --- modality encoders, block-diagonally fused per layer (all ReLU) ------
    enc_ws = []
    for dims in enc_dims:
        ws = []
        for l in range(len(dims) - 1):
            key, sub = jax.random.split(key)
            ws.append(_xavier(sub, dims[l], dims[l + 1]))
        enc_ws.append(ws)
    for l in range(n_enc_l):
        W = _block_diag([enc_ws[m][l] for m in range(len(enc_dims))])
        layers.append((W, jnp.zeros((W.shape[1],), jnp.float32), "relu"))

    # --- shared encoder: MLP + Tanh ------------------------------------------
    for l in range(len(in_shared) - 1):
        key, sub = jax.random.split(key)
        W = _xavier(sub, in_shared[l], in_shared[l + 1])
        act = "tanh" if l == len(in_shared) - 2 else "relu"
        layers.append((W, jnp.zeros((W.shape[1],), jnp.float32), act))
    z_layer = len(layers) - 1
    z_dim = in_shared[-1]

    # --- shared decoder: MLP + ReLU ------------------------------------------
    for l in range(len(out_shared) - 1):
        key, sub = jax.random.split(key)
        W = _xavier(sub, out_shared[l], out_shared[l + 1])
        layers.append((W, jnp.zeros((W.shape[1],), jnp.float32), "relu"))

    # --- modality decoders, block-diagonally fused (no final activation) -----
    dec_ws = []
    for dims in dec_dims:
        ws = []
        for l in range(len(dims) - 1):
            key, sub = jax.random.split(key)
            ws.append(_xavier(sub, dims[l], dims[l + 1]))
        dec_ws.append(ws)
    for l in range(n_dec_l):
        W = _block_diag([dec_ws[m][l] for m in range(len(dec_dims))])
        act = "relu" if l < n_dec_l - 1 else "none"
        layers.append((W, jnp.zeros((W.shape[1],), jnp.float32), act))

    # --- pad every layer to a (128, 128) tile, stack into slabs --------------
    # NOTE: padded rows/cols of W and padded bias lanes MUST stay exactly zero
    # so padded lanes never leak into later block-diagonal layers.
    L = len(layers)
    w_slab = jnp.zeros((L, LANE, LANE), jnp.float32)
    b_slab = jnp.zeros((L, LANE), jnp.float32)          # 2-D: no sublane padding waste
    acts = []
    for l, (W, b, a) in enumerate(layers):
        fi, fo = W.shape
        assert fi <= LANE and fo <= LANE, "feature dims must be <= 128"
        w_slab = w_slab.at[l, :fi, :fo].set(W)
        b_slab = b_slab.at[l, :fo].set(b)
        acts.append(a)

    params = {
        "w": w_slab.astype(jnp.bfloat16),   # bf16 MXU operands
        "b": b_slab,                        # f32 bias / elementwise path
        "acts": tuple(acts),
        "z_layer": z_layer,
        "z_dim": z_dim,
        "dec_out_dims": [d[-1] for d in dec_dims],
    }
    return params, layers   # layers kept (f32) for the pure-JAX reference


# ----------------------------------------------------------------------------
# Fused forward (single pallas_call).
# ----------------------------------------------------------------------------
def blend_vae_forward(xs, params):
    w_slab, b_slab = params["w"], params["b"]
    acts, z_layer = params["acts"], params["z_layer"]
    z_dim, dec_out_dims = params["z_dim"], params["dec_out_dims"]

    L = w_slab.shape[0]
    batch = xs[0].shape[0]

    # pack inputs: concat modalities, cast to bf16, zero-pad to 128 lanes
    x_cat = jnp.concatenate([x.astype(jnp.float32) for x in xs], axis=1)
    d_in = x_cat.shape[1]
    assert d_in <= LANE

    # ---- batch tiling: big tiles, but >= 2 tiles whenever possible (v7x) ----
    batch_r = _round_up(batch, MIN_TILE_B)
    if batch_r >= 2 * MIN_TILE_B:
        num_tiles = max(2, pl.cdiv(batch_r, MAX_TILE_B))
    else:
        num_tiles = 1
    tile_b = _round_up(pl.cdiv(batch_r, num_tiles), MIN_TILE_B)
    batch_p = tile_b * num_tiles

    x_pad = jnp.zeros((batch_p, LANE), jnp.bfloat16)
    x_pad = x_pad.at[:batch, :d_in].set(x_cat.astype(jnp.bfloat16))

    flops = 2 * L * batch_p * LANE * LANE
    transcendentals = batch_p * LANE * sum(a == "tanh" for a in acts)
    bytes_accessed = (x_pad.size * 2 + w_slab.size * 2 + b_slab.size * 4
                      + 2 * batch_p * LANE * 4)

    def call(single_buffer_consts):
        # weight / bias blocks never change across the grid -> single buffer
        const_kw = {"pipeline_mode": pl.Buffered(1)} if single_buffer_consts else {}
        grid_spec = pltpu.PrefetchScalarGridSpec(
            num_scalar_prefetch=0,
            grid=(num_tiles,),
            in_specs=[
                pl.BlockSpec((tile_b, LANE), lambda i: (i, 0)),            # activations
                pl.BlockSpec((L, LANE, LANE), lambda i: (0, 0, 0), **const_kw),  # weights
                pl.BlockSpec((L, LANE), lambda i: (0, 0), **const_kw),           # biases
            ],
            out_specs=[
                pl.BlockSpec((tile_b, LANE), lambda i: (i, 0)),   # z plane
                pl.BlockSpec((tile_b, LANE), lambda i: (i, 0)),   # decoder output
            ],
        )
        return pl.pallas_call(
            _make_fused_kernel(acts, z_layer),
            out_shape=(jax.ShapeDtypeStruct((batch_p, LANE), jnp.float32),
                       jax.ShapeDtypeStruct((batch_p, LANE), jnp.float32)),
            grid_spec=grid_spec,
            compiler_params=pltpu.CompilerParams(
                dimension_semantics=("parallel",),
                vmem_limit_bytes=32 * 1024 * 1024,
            ),
            cost_estimate=pl.CostEstimate(
                flops=flops,
                transcendentals=transcendentals,
                bytes_accessed=bytes_accessed),
        )(x_pad, w_slab, b_slab)

    try:
        z_slab, dec_slab = call(True)
    except Exception:
        # Fallback if this Pallas build rejects Buffered(1) single-buffering.
        z_slab, dec_slab = call(False)

    # unpack the lane-dense outputs (cheap XLA slices)
    z = z_slab[:batch, :z_dim]
    dec = dec_slab[:batch, :]
    out_mu, out_logstd = [], []
    begin = 0
    for d in dec_out_dims:
        o = dec[:, begin:begin + d]
        out_mu.append(o[:, :d // 2])
        out_logstd.append(o[:, d // 2:])
        begin += d
    return z, out_mu, out_logstd


# ----------------------------------------------------------------------------
# Pure-JAX f32 reference (same math as the PyTorch forward) for validation.
# ----------------------------------------------------------------------------
def blend_vae_reference(xs, layers, z_layer, z_dim, dec_out_dims):
    h = jnp.concatenate(xs, axis=1).astype(jnp.float32)
    z = None
    for l, (W, b, a) in enumerate(layers):
        h = h @ W + b
        if a == "relu":
            h = jnp.maximum(h, 0.0)
        elif a == "tanh":
            h = jnp.tanh(h)
        if l == z_layer:
            z = h
    out_mu, out_logstd = [], []
    begin = 0
    for d in dec_out_dims:
        o = h[:, begin:begin + d]
        out_mu.append(o[:, :d // 2])
        out_logstd.append(o[:, d // 2:])
        begin += d
    return z, out_mu, out_logstd


# ----------------------------------------------------------------------------
# Demo
# ----------------------------------------------------------------------------
if __name__ == "__main__":
    # modality 0: 16 -> 32 -> 24 (enc, ReLU) ; modality 1: 12 -> 32 -> 24
    # shared_encoder: 48 -> 64 -> 32 (+Tanh) => z has 32 features
    # shared_decoder: 32 -> 64 -> 48 (+ReLU)
    # decoder 0: 24 -> 32 -> 32 (mu/logstd 16 each) ; decoder 1: 24 -> 32 -> 16
    in_chanel = [[-1, 16, 32, 24], [-1, 12, 32, 24]]
    out_chanel = [[-1, 24, 32, 32], [-1, 24, 32, 16]]
    in_shared = [48, 64, 32]
    out_shared = [32, 64, 48]

    key = jax.random.PRNGKey(0)
    key, kp = jax.random.split(key)
    params, ref_layers = build_blend_vae_params(
        kp, in_chanel, out_chanel, in_shared, out_shared)

    tol = 1e-1  # bf16 MXU operands vs f32 reference

    # run at two batch sizes: tiny (single tile) and one that exercises the
    # multi-tile "parallel" grid + batch padding path.
    for batch in (8, 48):
        key, k0, k1 = jax.random.split(key, 3)
        x0 = jax.random.normal(k0, (batch, in_chanel[0][1]), jnp.float32)
        x1 = jax.random.normal(k1, (batch, in_chanel[1][1]), jnp.float32)

        z, out_mu, out_logstd = blend_vae_forward([x0, x1], params)
        jax.block_until_ready((z, out_mu, out_logstd))

        # shape checks
        assert z.shape == (batch, in_shared[-1])
        assert out_mu[0].shape == (batch, out_chanel[0][-1] // 2)
        assert out_logstd[0].shape == (batch, out_chanel[0][-1] // 2)
        assert out_mu[1].shape == (batch, out_chanel[1][-1] // 2)
        assert out_logstd[1].shape == (batch, out_chanel[1][-1] // 2)

        # numerical check vs f32 reference
        z_r, mu_r, ls_r = blend_vae_reference(
            [x0, x1], ref_layers, params["z_layer"], params["z_dim"],
            params["dec_out_dims"])
        assert float(jnp.max(jnp.abs(z - z_r))) < tol
        for a, b in zip(out_mu, mu_r):
            assert float(jnp.max(jnp.abs(a - b))) < tol
        for a, b in zip(out_logstd, ls_r):
            assert float(jnp.max(jnp.abs(a - b))) < tol

    print("KERNEL_OK")
</pallas_src>

<mosaic_0001>
module attributes {stable_mosaic.version = 11 : i64} {
  func.func @kernel(%arg0: i32, %arg1: memref<16x128xbf16, #tpu.memory_space<vmem>>, %arg2: memref<8x128x128xbf16, #tpu.memory_space<vmem>>, %arg3: memref<8x128xf32, #tpu.memory_space<vmem>>, %arg4: memref<16x128xf32, #tpu.memory_space<vmem>>, %arg5: memref<16x128xf32, #tpu.memory_space<vmem>>) attributes {dimension_semantics = [#tpu.dimension_semantics<parallel>], iteration_bounds = array<i64: 1>, scalar_prefetch = 0 : i64, scratch_operands = 0 : i64, tpu.core_type = #tpu.core_type<tc>, window_params = [{transform_indices = @transform_0, window_bounds = array<i64: 16, 128>}, {pipeline_mode = #tpu.pipeline_mode<synchronous>, transform_indices = @transform_1, window_bounds = array<i64: 8, 128, 128>}, {pipeline_mode = #tpu.pipeline_mode<synchronous>, transform_indices = @transform_2, window_bounds = array<i64: 8, 128>}, {transform_indices = @transform_3, window_bounds = array<i64: 16, 128>}, {transform_indices = @transform_4, window_bounds = array<i64: 16, 128>}]} {
    %c0 = arith.constant 0 : index
    %c0_0 = arith.constant 0 : index
    %0 = vector.load %arg1[%c0, %c0_0] : memref<16x128xbf16, #tpu.memory_space<vmem>>, vector<16x128xbf16>
    %c0_1 = arith.constant 0 : index
    %c0_2 = arith.constant 0 : index
    %1 = vector.load %arg3[%c0_1, %c0_2] : memref<8x128xf32, #tpu.memory_space<vmem>>, vector<8x128xf32>
    %c0_3 = arith.constant 0 : index
    %c0_4 = arith.constant 0 : index
    %c0_5 = arith.constant 0 : index
    %2 = vector.load %arg2[%c0_3, %c0_4, %c0_5] : memref<8x128x128xbf16, #tpu.memory_space<vmem>>, vector<1x128x128xbf16>
    %3 = vector.shape_cast %2 : vector<1x128x128xbf16> to vector<128x128xbf16>
    %cst = arith.constant dense<0.000000e+00> : vector<16x128xf32>
    %4 = tpu.matmul %0, %3, %cst {dimension_numbers = #tpu.dot_dimension_numbers<[1], [0], [0], [1], [0, 0, 1, 1], [], []>} : vector<16x128xbf16>, vector<128x128xbf16>, vector<16x128xf32> -> vector<16x128xf32>
    %5 = vector.extract_strided_slice %1 {offsets = [0, 0], sizes = [1, 128], strides = [1, 1]} : vector<8x128xf32> to vector<1x128xf32>
    %6 = vector.broadcast %5 : vector<1x128xf32> to vector<16x128xf32>
    %7 = arith.addf %4, %6 : vector<16x128xf32>
    %cst_6 = arith.constant 0.000000e+00 : f32
    %8 = vector.broadcast %cst_6 : f32 to vector<16x128xf32>
    %9 = arith.maximumf %7, %8 : vector<16x128xf32>
    %10 = arith.truncf %9 : vector<16x128xf32> to vector<16x128xbf16>
    %c1 = arith.constant 1 : index
    %c0_7 = arith.constant 0 : index
    %c0_8 = arith.constant 0 : index
    %11 = vector.load %arg2[%c1, %c0_7, %c0_8] : memref<8x128x128xbf16, #tpu.memory_space<vmem>>, vector<1x128x128xbf16>
    %12 = vector.shape_cast %11 : vector<1x128x128xbf16> to vector<128x128xbf16>
    %cst_9 = arith.constant dense<0.000000e+00> : vector<16x128xf32>
    %13 = tpu.matmul %10, %12, %cst_9 {dimension_numbers = #tpu.dot_dimension_numbers<[1], [0], [0], [1], [0, 0, 1, 1], [], []>} : vector<16x128xbf16>, vector<128x128xbf16>, vector<16x128xf32> -> vector<16x128xf32>
    %14 = vector.extract_strided_slice %1 {offsets = [1, 0], sizes = [1, 128], strides = [1, 1]} : vector<8x128xf32> to vector<1x128xf32>
    %15 = vector.broadcast %14 : vector<1x128xf32> to vector<16x128xf32>
    %16 = arith.addf %13, %15 : vector<16x128xf32>
    %cst_10 = arith.constant 0.000000e+00 : f32
    %17 = vector.broadcast %cst_10 : f32 to vector<16x128xf32>
    %18 = arith.maximumf %16, %17 : vector<16x128xf32>
    %19 = arith.truncf %18 : vector<16x128xf32> to vector<16x128xbf16>
    %c2 = arith.constant 2 : index
    %c0_11 = arith.constant 0 : index
    %c0_12 = arith.constant 0 : index
    %20 = vector.load %arg2[%c2, %c0_11, %c0_12] : memref<8x128x128xbf16, #tpu.memory_space<vmem>>, vector<1x128x128xbf16>
    %21 = vector.shape_cast %20 : vector<1x128x128xbf16> to vector<128x128xbf16>
    %cst_13 = arith.constant dense<0.000000e+00> : vector<16x128xf32>
    %22 = tpu.matmul %19, %21, %cst_13 {dimension_numbers = #tpu.dot_dimension_numbers<[1], [0], [0], [1], [0, 0, 1, 1], [], []>} : vector<16x128xbf16>, vector<128x128xbf16>, vector<16x128xf32> -> vector<16x128xf32>
    %23 = vector.extract_strided_slice %1 {offsets = [2, 0], sizes = [1, 128], strides = [1, 1]} : vector<8x128xf32> to vector<1x128xf32>
    %24 = vector.broadcast %23 : vector<1x128xf32> to vector<16x128xf32>
    %25 = arith.addf %22, %24 : vector<16x128xf32>
    %cst_14 = arith.constant 0.000000e+00 : f32
    %26 = vector.broadcast %cst_14 : f32 to vector<16x128xf32>
    %27 = arith.maximumf %25, %26 : vector<16x128xf32>
    %28 = arith.truncf %27 : vector<16x128xf32> to vector<16x128xbf16>
    %c3 = arith.constant 3 : index
    %c0_15 = arith.constant 0 : index
    %c0_16 = arith.constant 0 : index
    %29 = vector.load %arg2[%c3, %c0_15, %c0_16] : memref<8x128x128xbf16, #tpu.memory_space<vmem>>, vector<1x128x128xbf16>
    %30 = vector.shape_cast %29 : vector<1x128x128xbf16> to vector<128x128xbf16>
    %cst_17 = arith.constant dense<0.000000e+00> : vector<16x128xf32>
    %31 = tpu.matmul %28, %30, %cst_17 {dimension_numbers = #tpu.dot_dimension_numbers<[1], [0], [0], [1], [0, 0, 1, 1], [], []>} : vector<16x128xbf16>, vector<128x128xbf16>, vector<16x128xf32> -> vector<16x128xf32>
    %32 = vector.extract_strided_slice %1 {offsets = [3, 0], sizes = [1, 128], strides = [1, 1]} : vector<8x128xf32> to vector<1x128xf32>
    %33 = vector.broadcast %32 : vector<1x128xf32> to vector<16x128xf32>
    %34 = arith.addf %31, %33 : vector<16x128xf32>
    %35 = math.tanh %34 : vector<16x128xf32>
    %c0_18 = arith.constant 0 : index
    %c0_19 = arith.constant 0 : index
    %36 = vector.load %arg4[%c0_18, %c0_19] : memref<16x128xf32, #tpu.memory_space<vmem>>, vector<16x128xf32>
    tpu.vector_store %arg4[%c0_18, %c0_19], %35 {strides = array<i32>} : memref<16x128xf32, #tpu.memory_space<vmem>>, vector<16x128xf32>,
    %37 = arith.truncf %35 : vector<16x128xf32> to vector<16x128xbf16>
    %c4 = arith.constant 4 : index
    %c0_20 = arith.constant 0 : index
    %c0_21 = arith.constant 0 : index
    %38 = vector.load %arg2[%c4, %c0_20, %c0_21] : memref<8x128x128xbf16, #tpu.memory_space<vmem>>, vector<1x128x128xbf16>
    %39 = vector.shape_cast %38 : vector<1x128x128xbf16> to vector<128x128xbf16>
    %cst_22 = arith.constant dense<0.000000e+00> : vector<16x128xf32>
    %40 = tpu.matmul %37, %39, %cst_22 {dimension_numbers = #tpu.dot_dimension_numbers<[1], [0], [0], [1], [0, 0, 1, 1], [], []>} : vector<16x128xbf16>, vector<128x128xbf16>, vector<16x128xf32> -> vector<16x128xf32>
    %41 = vector.extract_strided_slice %1 {offsets = [4, 0], sizes = [1, 128], strides = [1, 1]} : vector<8x128xf32> to vector<1x128xf32>
    %42 = vector.broadcast %41 : vector<1x128xf32> to vector<16x128xf32>
    %43 = arith.addf %40, %42 : vector<16x128xf32>
    %cst_23 = arith.constant 0.000000e+00 : f32
    %44 = vector.broadcast %cst_23 : f32 to vector<16x128xf32>
    %45 = arith.maximumf %43, %44 : vector<16x128xf32>
    %46 = arith.truncf %45 : vector<16x128xf32> to vector<16x128xbf16>
    %c5 = arith.constant 5 : index
    %c0_24 = arith.constant 0 : index
    %c0_25 = arith.constant 0 : index
    %47 = vector.load %arg2[%c5, %c0_24, %c0_25] : memref<8x128x128xbf16, #tpu.memory_space<vmem>>, vector<1x128x128xbf16>
    %48 = vector.shape_cast %47 : vector<1x128x128xbf16> to vector<128x128xbf16>
    %cst_26 = arith.constant dense<0.000000e+00> : vector<16x128xf32>
    %49 = tpu.matmul %46, %48, %cst_26 {dimension_numbers = #tpu.dot_dimension_numbers<[1], [0], [0], [1], [0, 0, 1, 1], [], []>} : vector<16x128xbf16>, vector<128x128xbf16>, vector<16x128xf32> -> vector<16x128xf32>
    %50 = vector.extract_strided_slice %1 {offsets = [5, 0], sizes = [1, 128], strides = [1, 1]} : vector<8x128xf32> to vector<1x128xf32>
    %51 = vector.broadcast %50 : vector<1x128xf32> to vector<16x128xf32>
    %52 = arith.addf %49, %51 : vector<16x128xf32>
    %cst_27 = arith.constant 0.000000e+00 : f32
    %53 = vector.broadcast %cst_27 : f32 to vector<16x128xf32>
    %54 = arith.maximumf %52, %53 : vector<16x128xf32>
    %55 = arith.truncf %54 : vector<16x128xf32> to vector<16x128xbf16>
    %c6 = arith.constant 6 : index
    %c0_28 = arith.constant 0 : index
    %c0_29 = arith.constant 0 : index
    %56 = vector.load %arg2[%c6, %c0_28, %c0_29] : memref<8x128x128xbf16, #tpu.memory_space<vmem>>, vector<1x128x128xbf16>
    %57 = vector.shape_cast %56 : vector<1x128x128xbf16> to vector<128x128xbf16>
    %cst_30 = arith.constant dense<0.000000e+00> : vector<16x128xf32>
    %58 = tpu.matmul %55, %57, %cst_30 {dimension_numbers = #tpu.dot_dimension_numbers<[1], [0], [0], [1], [0, 0, 1, 1], [], []>} : vector<16x128xbf16>, vector<128x128xbf16>, vector<16x128xf32> -> vector<16x128xf32>
    %59 = vector.extract_strided_slice %1 {offsets = [6, 0], sizes = [1, 128], strides = [1, 1]} : vector<8x128xf32> to vector<1x128xf32>
    %60 = vector.broadcast %59 : vector<1x128xf32> to vector<16x128xf32>
    %61 = arith.addf %58, %60 : vector<16x128xf32>
    %cst_31 = arith.constant 0.000000e+00 : f32
    %62 = vector.broadcast %cst_31 : f32 to vector<16x128xf32>
    %63 = arith.maximumf %61, %62 : vector<16x128xf32>
    %64 = arith.truncf %63 : vector<16x128xf32> to vector<16x128xbf16>
    %c7 = arith.constant 7 : index
    %c0_32 = arith.constant 0 : index
    %c0_33 = arith.constant 0 : index
    %65 = vector.load %arg2[%c7, %c0_32, %c0_33] : memref<8x128x128xbf16, #tpu.memory_space<vmem>>, vector<1x128x128xbf16>
    %66 = vector.shape_cast %65 : vector<1x128x128xbf16> to vector<128x128xbf16>
    %cst_34 = arith.constant dense<0.000000e+00> : vector<16x128xf32>
    %67 = tpu.matmul %64, %66, %cst_34 {dimension_numbers = #tpu.dot_dimension_numbers<[1], [0], [0], [1], [0, 0, 1, 1], [], []>} : vector<16x128xbf16>, vector<128x128xbf16>, vector<16x128xf32> -> vector<16x128xf32>
    %68 = vector.extract_strided_slice %1 {offsets = [7, 0], sizes = [1, 128], strides = [1, 1]} : vector<8x128xf32> to vector<1x128xf32>
    %69 = vector.broadcast %68 : vector<1x128xf32> to vector<16x128xf32>
    %70 = arith.addf %67, %69 : vector<16x128xf32>
    %c0_35 = arith.constant 0 : index
    %c0_36 = arith.constant 0 : index
    %71 = vector.load %arg5[%c0_35, %c0_36] : memref<16x128xf32, #tpu.memory_space<vmem>>, vector<16x128xf32>
    tpu.vector_store %arg5[%c0_35, %c0_36], %70 {strides = array<i32>} : memref<16x128xf32, #tpu.memory_space<vmem>>, vector<16x128xf32>,
    return
  }
  func.func @transform_0(%arg0: i32) -> (i32, i32) {
    %c0_i32 = arith.constant 0 : i32
    %c0_i32_0 = arith.constant 0 : i32
    return %arg0, %c0_i32 : i32, i32
  }
  func.func @transform_1(%arg0: i32) -> (i32, i32, i32) {
    %c0_i32 = arith.constant 0 : i32
    %c0_i32_0 = arith.constant 0 : i32
    %c0_i32_1 = arith.constant 0 : i32
    %c0_i32_2 = arith.constant 0 : i32
    return %c0_i32, %c0_i32_0, %c0_i32_1 : i32, i32, i32
  }
  func.func @transform_2(%arg0: i32) -> (i32, i32) {
    %c0_i32 = arith.constant 0 : i32
    %c0_i32_0 = arith.constant 0 : i32
    %c0_i32_1 = arith.constant 0 : i32
    return %c0_i32, %c0_i32_0 : i32, i32
  }
  func.func @transform_3(%arg0: i32) -> (i32, i32) {
    %c0_i32 = arith.constant 0 : i32
    %c0_i32_0 = arith.constant 0 : i32
    return %arg0, %c0_i32 : i32, i32
  }
  func.func @transform_4(%arg0: i32) -> (i32, i32) {
    %c0_i32 = arith.constant 0 : i32
    %c0_i32_0 = arith.constant 0 : i32
    return %arg0, %c0_i32 : i32, i32
  }
}

module attributes {stable_mosaic.version = 11 : i64} {
  func.func @kernel(%arg0: i32, %arg1: memref<16x128xbf16, #tpu.memory_space<vmem>>, %arg2: memref<8x128x128xbf16, #tpu.memory_space<vmem>>, %arg3: memref<8x128xf32, #tpu.memory_space<vmem>>, %arg4: memref<16x128xf32, #tpu.memory_space<vmem>>, %arg5: memref<16x128xf32, #tpu.memory_space<vmem>>) attributes {dimension_semantics = [#tpu.dimension_semantics<parallel>], iteration_bounds = array<i64: 1>, scalar_prefetch = 0 : i64, scratch_operands = 0 : i64, tpu.core_type = #tpu.core_type<tc>, window_params = [{transform_indices = @transform_0, window_bounds = array<i64: 16, 128>}, {pipeline_mode = #tpu.pipeline_mode<synchronous>, transform_indices = @transform_1, window_bounds = array<i64: 8, 128, 128>}, {pipeline_mode = #tpu.pipeline_mode<synchronous>, transform_indices = @transform_2, window_bounds = array<i64: 8, 128>}, {transform_indices = @transform_3, window_bounds = array<i64: 16, 128>}, {transform_indices = @transform_4, window_bounds = array<i64: 16, 128>}]} {
    %c0 = arith.constant 0 : index
    %c0_0 = arith.constant 0 : index
    %0 = vector.load %arg1[%c0, %c0_0] : memref<16x128xbf16, #tpu.memory_space<vmem>>, vector<16x128xbf16>
    %c0_1 = arith.constant 0 : index
    %c0_2 = arith.constant 0 : index
    %1 = vector.load %arg3[%c0_1, %c0_2] : memref<8x128xf32, #tpu.memory_space<vmem>>, vector<8x128xf32>
    %c0_3 = arith.constant 0 : index
    %c0_4 = arith.constant 0 : index
    %c0_5 = arith.constant 0 : index
    %2 = vector.load %arg2[%c0_3, %c0_4, %c0_5] : memref<8x128x128xbf16, #tpu.memory_space<vmem>>, vector<1x128x128xbf16>
    %3 = vector.shape_cast %2 : vector<1x128x128xbf16> to vector<128x128xbf16>
    %cst = arith.constant dense<0.000000e+00> : vector<16x128xf32>
    %4 = tpu.matmul %0, %3, %cst {dimension_numbers = #tpu.dot_dimension_numbers<[1], [0], [0], [1], [0, 0, 1, 1], [], []>} : vector<16x128xbf16>, vector<128x128xbf16>, vector<16x128xf32> -> vector<16x128xf32>
    %5 = vector.extract_strided_slice %1 {offsets = [0, 0], sizes = [1, 128], strides = [1, 1]} : vector<8x128xf32> to vector<1x128xf32>
    %6 = vector.broadcast %5 : vector<1x128xf32> to vector<16x128xf32>
    %7 = arith.addf %4, %6 : vector<16x128xf32>
    %cst_6 = arith.constant 0.000000e+00 : f32
    %8 = vector.broadcast %cst_6 : f32 to vector<16x128xf32>
    %9 = arith.maximumf %7, %8 : vector<16x128xf32>
    %10 = arith.truncf %9 : vector<16x128xf32> to vector<16x128xbf16>
    %c1 = arith.constant 1 : index
    %c0_7 = arith.constant 0 : index
    %c0_8 = arith.constant 0 : index
    %11 = vector.load %arg2[%c1, %c0_7, %c0_8] : memref<8x128x128xbf16, #tpu.memory_space<vmem>>, vector<1x128x128xbf16>
    %12 = vector.shape_cast %11 : vector<1x128x128xbf16> to vector<128x128xbf16>
    %cst_9 = arith.constant dense<0.000000e+00> : vector<16x128xf32>
    %13 = tpu.matmul %10, %12, %cst_9 {dimension_numbers = #tpu.dot_dimension_numbers<[1], [0], [0], [1], [0, 0, 1, 1], [], []>} : vector<16x128xbf16>, vector<128x128xbf16>, vector<16x128xf32> -> vector<16x128xf32>
    %14 = vector.extract_strided_slice %1 {offsets = [1, 0], sizes = [1, 128], strides = [1, 1]} : vector<8x128xf32> to vector<1x128xf32>
    %15 = vector.broadcast %14 : vector<1x128xf32> to vector<16x128xf32>
    %16 = arith.addf %13, %15 : vector<16x128xf32>
    %cst_10 = arith.constant 0.000000e+00 : f32
    %17 = vector.broadcast %cst_10 : f32 to vector<16x128xf32>
    %18 = arith.maximumf %16, %17 : vector<16x128xf32>
    %19 = arith.truncf %18 : vector<16x128xf32> to vector<16x128xbf16>
    %c2 = arith.constant 2 : index
    %c0_11 = arith.constant 0 : index
    %c0_12 = arith.constant 0 : index
    %20 = vector.load %arg2[%c2, %c0_11, %c0_12] : memref<8x128x128xbf16, #tpu.memory_space<vmem>>, vector<1x128x128xbf16>
    %21 = vector.shape_cast %20 : vector<1x128x128xbf16> to vector<128x128xbf16>
    %cst_13 = arith.constant dense<0.000000e+00> : vector<16x128xf32>
    %22 = tpu.matmul %19, %21, %cst_13 {dimension_numbers = #tpu.dot_dimension_numbers<[1], [0], [0], [1], [0, 0, 1, 1], [], []>} : vector<16x128xbf16>, vector<128x128xbf16>, vector<16x128xf32> -> vector<16x128xf32>
    %23 = vector.extract_strided_slice %1 {offsets = [2, 0], sizes = [1, 128], strides = [1, 1]} : vector<8x128xf32> to vector<1x128xf32>
    %24 = vector.broadcast %23 : vector<1x128xf32> to vector<16x128xf32>
    %25 = arith.addf %22, %24 : vector<16x128xf32>
    %cst_14 = arith.constant 0.000000e+00 : f32
    %26 = vector.broadcast %cst_14 : f32 to vector<16x128xf32>
    %27 = arith.maximumf %25, %26 : vector<16x128xf32>
    %28 = arith.truncf %27 : vector<16x128xf32> to vector<16x128xbf16>
    %c3 = arith.constant 3 : index
    %c0_15 = arith.constant 0 : index
    %c0_16 = arith.constant 0 : index
    %29 = vector.load %arg2[%c3, %c0_15, %c0_16] : memref<8x128x128xbf16, #tpu.memory_space<vmem>>, vector<1x128x128xbf16>
    %30 = vector.shape_cast %29 : vector<1x128x128xbf16> to vector<128x128xbf16>
    %cst_17 = arith.constant dense<0.000000e+00> : vector<16x128xf32>
    %31 = tpu.matmul %28, %30, %cst_17 {dimension_numbers = #tpu.dot_dimension_numbers<[1], [0], [0], [1], [0, 0, 1, 1], [], []>} : vector<16x128xbf16>, vector<128x128xbf16>, vector<16x128xf32> -> vector<16x128xf32>
    %32 = vector.extract_strided_slice %1 {offsets = [3, 0], sizes = [1, 128], strides = [1, 1]} : vector<8x128xf32> to vector<1x128xf32>
    %33 = vector.broadcast %32 : vector<1x128xf32> to vector<16x128xf32>
    %34 = arith.addf %31, %33 : vector<16x128xf32>
    %35 = math.tanh %34 : vector<16x128xf32>
    %c0_18 = arith.constant 0 : index
    %c0_19 = arith.constant 0 : index
    %36 = vector.load %arg4[%c0_18, %c0_19] : memref<16x128xf32, #tpu.memory_space<vmem>>, vector<16x128xf32>
    tpu.vector_store %arg4[%c0_18, %c0_19], %35 {strides = array<i32>} : memref<16x128xf32, #tpu.memory_space<vmem>>, vector<16x128xf32>,
    %37 = arith.truncf %35 : vector<16x128xf32> to vector<16x128xbf16>
    %c4 = arith.constant 4 : index
    %c0_20 = arith.constant 0 : index
    %c0_21 = arith.constant 0 : index
    %38 = vector.load %arg2[%c4, %c0_20, %c0_21] : memref<8x128x128xbf16, #tpu.memory_space<vmem>>, vector<1x128x128xbf16>
    %39 = vector.shape_cast %38 : vector<1x128x128xbf16> to vector<128x128xbf16>
    %cst_22 = arith.constant dense<0.000000e+00> : vector<16x128xf32>
    %40 = tpu.matmul %37, %39, %cst_22 {dimension_numbers = #tpu.dot_dimension_numbers<[1], [0], [0], [1], [0, 0, 1, 1], [], []>} : vector<16x128xbf16>, vector<128x128xbf16>, vector<16x128xf32> -> vector<16x128xf32>
    %41 = vector.extract_strided_slice %1 {offsets = [4, 0], sizes = [1, 128], strides = [1, 1]} : vector<8x128xf32> to vector<1x128xf32>
    %42 = vector.broadcast %41 : vector<1x128xf32> to vector<16x128xf32>
    %43 = arith.addf %40, %42 : vector<16x128xf32>
    %cst_23 = arith.constant 0.000000e+00 : f32
    %44 = vector.broadcast %cst_23 : f32 to vector<16x128xf32>
    %45 = arith.maximumf %43, %44 : vector<16x128xf32>
    %46 = arith.truncf %45 : vector<16x128xf32> to vector<16x128xbf16>
    %c5 = arith.constant 5 : index
    %c0_24 = arith.constant 0 : index
    %c0_25 = arith.constant 0 : index
    %47 = vector.load %arg2[%c5, %c0_24, %c0_25] : memref<8x128x128xbf16, #tpu.memory_space<vmem>>, vector<1x128x128xbf16>
    %48 = vector.shape_cast %47 : vector<1x128x128xbf16> to vector<128x128xbf16>
    %cst_26 = arith.constant dense<0.000000e+00> : vector<16x128xf32>
    %49 = tpu.matmul %46, %48, %cst_26 {dimension_numbers = #tpu.dot_dimension_numbers<[1], [0], [0], [1], [0, 0, 1, 1], [], []>} : vector<16x128xbf16>, vector<128x128xbf16>, vector<16x128xf32> -> vector<16x128xf32>
    %50 = vector.extract_strided_slice %1 {offsets = [5, 0], sizes = [1, 128], strides = [1, 1]} : vector<8x128xf32> to vector<1x128xf32>
    %51 = vector.broadcast %50 : vector<1x128xf32> to vector<16x128xf32>
    %52 = arith.addf %49, %51 : vector<16x128xf32>
    %cst_27 = arith.constant 0.000000e+00 : f32
    %53 = vector.broadcast %cst_27 : f32 to vector<16x128xf32>
    %54 = arith.maximumf %52, %53 : vector<16x128xf32>
    %55 = arith.truncf %54 : vector<16x128xf32> to vector<16x128xbf16>
    %c6 = arith.constant 6 : index
    %c0_28 = arith.constant 0 : index
    %c0_29 = arith.constant 0 : index
    %56 = vector.load %arg2[%c6, %c0_28, %c0_29] : memref<8x128x128xbf16, #tpu.memory_space<vmem>>, vector<1x128x128xbf16>
    %57 = vector.shape_cast %56 : vector<1x128x128xbf16> to vector<128x128xbf16>
    %cst_30 = arith.constant dense<0.000000e+00> : vector<16x128xf32>
    %58 = tpu.matmul %55, %57, %cst_30 {dimension_numbers = #tpu.dot_dimension_numbers<[1], [0], [0], [1], [0, 0, 1, 1], [], []>} : vector<16x128xbf16>, vector<128x128xbf16>, vector<16x128xf32> -> vector<16x128xf32>
    %59 = vector.extract_strided_slice %1 {offsets = [6, 0], sizes = [1, 128], strides = [1, 1]} : vector<8x128xf32> to vector<1x128xf32>
    %60 = vector.broadcast %59 : vector<1x128xf32> to vector<16x128xf32>
    %61 = arith.addf %58, %60 : vector<16x128xf32>
    %cst_31 = arith.constant 0.000000e+00 : f32
    %62 = vector.broadcast %cst_31 : f32 to vector<16x128xf32>
    %63 = arith.maximumf %61, %62 : vector<16x128xf32>
    %64 = arith.truncf %63 : vector<16x128xf32> to vector<16x128xbf16>
    %c7 = arith.constant 7 : index
    %c0_32 = arith.constant 0 : index
    %c0_33 = arith.constant 0 : index
    %65 = vector.load %arg2[%c7, %c0_32, %c0_33] : memref<8x128x128xbf16, #tpu.memory_space<vmem>>, vector<1x128x128xbf16>
    %66 = vector.shape_cast %65 : vector<1x128x128xbf16> to vector<128x128xbf16>
    %cst_34 = arith.constant dense<0.000000e+00> : vector<16x128xf32>
    %67 = tpu.matmul %64, %66, %cst_34 {dimension_numbers = #tpu.dot_dimension_numbers<[1], [0], [0], [1], [0, 0, 1, 1], [], []>} : vector<16x128xbf16>, vector<128x128xbf16>, vector<16x128xf32> -> vector<16x128xf32>
    %68 = vector.extract_strided_slice %1 {offsets = [7, 0], sizes = [1, 128], strides = [1, 1]} : vector<8x128xf32> to vector<1x128xf32>
    %69 = vector.broadcast %68 : vector<1x128xf32> to vector<16x128xf32>
    %70 = arith.addf %67, %69 : vector<16x128xf32>
    %c0_35 = arith.constant 0 : index
    %c0_36 = arith.constant 0 : index
    %71 = vector.load %arg5[%c0_35, %c0_36] : memref<16x128xf32, #tpu.memory_space<vmem>>, vector<16x128xf32>
    tpu.vector_store %arg5[%c0_35, %c0_36], %70 {strides = array<i32>} : memref<16x128xf32, #tpu.memory_space<vmem>>, vector<16x128xf32>,
    return
  }
  func.func @transform_0(%arg0: i32) -> (i32, i32) {
    %c0_i32 = arith.constant 0 : i32
    %c0_i32_0 = arith.constant 0 : i32
    return %arg0, %c0_i32 : i32, i32
  }
  func.func @transform_1(%arg0: i32) -> (i32, i32, i32) {
    %c0_i32 = arith.constant 0 : i32
    %c0_i32_0 = arith.constant 0 : i32
    %c0_i32_1 = arith.constant 0 : i32
    %c0_i32_2 = arith.constant 0 : i32
    return %c0_i32, %c0_i32_0, %c0_i32_1 : i32, i32, i32
  }
  func.func @transform_2(%arg0: i32) -> (i32, i32) {
    %c0_i32 = arith.constant 0 : i32
    %c0_i32_0 = arith.constant 0 : i32
    %c0_i32_1 = arith.constant 0 : i32
    return %c0_i32, %c0_i32_0 : i32, i32
  }
  func.func @transform_3(%arg0: i32) -> (i32, i32) {
    %c0_i32 = arith.constant 0 : i32
    %c0_i32_0 = arith.constant 0 : i32
    return %arg0, %c0_i32 : i32, i32
  }
  func.func @transform_4(%arg0: i32) -> (i32, i32) {
    %c0_i32 = arith.constant 0 : i32
    %c0_i32_0 = arith.constant 0 : i32
    return %arg0, %c0_i32 : i32, i32
  }
}

</mosaic_0001>

<llo_original>
// kernel: tpu_custom_call.1
$region0: #{tpu_custom_call.1}
  #allocation0 [shape = 'u32[]', space=smem, size = 0x4, offset = 0x4, fixed_abs, tag = 'smem constant byte address 0x4 - core index']
  #allocation1 [shape = 'u32[144,128]{1,0:T(1,128)}', space=vmem, size = 0x12000, scoped, tag = 'internal scratch']
  %s0 = inlined_call_operand.hbm [shape: bf16[16,128], index: 0, kind: input, shape index: {}]
  %s1 = inlined_call_operand.hbm [shape: bf16[8,128,128], index: 1, kind: input, shape index: {}]
  %s2 = inlined_call_operand.hbm [shape: f32[8,128], index: 2, kind: input, shape index: {}]
  %s3 = inlined_call_operand.hbm [shape: f32[16,128], index: 3, kind: output, shape index: {0}]
  %s4 = inlined_call_operand.hbm [shape: f32[16,128], index: 4, kind: output, shape index: {1}]
  %5 = xla_tuple %s3, %s4
  %s6 = sld [smem:[#allocation0]]
  $region42: #{tpu_custom_call.1} parent=0
    _
  %s8 = ssub.s32 1, %s6
  %s9 = scalar_select 0, %s8, %s6
  $region1: #{tpu_custom_call.1} parent=0
    #allocation2 [shape = 'u8[4096]{0}', space=vmem, size = 0x1000, scoped, tag = 'input window, operand 0, single buffered']
    #allocation3 [shape = 's32[1]{0}', space=sflag, size = 0x4, scoped, tag = 'scoped memory for tpu_custom_call.1']
    #allocation4 [shape = 's32[1]{0}', space=sflag, size = 0x4, scoped, tag = 'scoped memory for tpu_custom_call.1']
    #allocation5 [shape = 'u8[262144]{0}', space=vmem, size = 0x40000, scoped, tag = 'input window, operand 1, single buffered']
    #allocation6 [shape = 's32[1]{0}', space=sflag, size = 0x4, scoped, tag = 'scoped memory for tpu_custom_call.1']
    #allocation7 [shape = 'u8[4096]{0}', space=vmem, size = 0x1000, scoped, tag = 'input window, operand 2, single buffered']
    #allocation8 [shape = 'u8[8192]{0}', space=vmem, size = 0x2000, scoped, tag = 'output window, operand 0, single buffered']
    #allocation9 [shape = 'u8[8192]{0}', space=vmem, size = 0x2000, scoped, tag = 'output window, operand 1, single buffered']
    #allocation10 [shape = 's32[1]{0}', space=sflag, size = 0x4, scoped, tag = 'scoped memory for tpu_custom_call.1']
    %10 = vsyncpa [#allocation3], 0
    %11 = vsyncpa [#allocation6], 0
    %12 = vsyncpa [#allocation4], 0
    %13 = vsyncpa [#allocation10], 0
    // Predicated region
    $region2: #{tpu_custom_call.1} parent=1 // pred_check
      _
    $region3: #{tpu_custom_call.1} parent=1 // pred_check_branch
      %15 = sbr.rel (0) target = $region5
    $region4: #{tpu_custom_call.1} parent=1 // pred_region
      %s17 = ssub.s32 128, 128
      %18 = vsyncadd [#allocation3], %s17
      %s19 = sshll.u32 [#allocation2], 4
      %s20 = int_to_ptr.vmem [resolvable:$true] %s19
      %25 = dma.hbm_to_vmem [thread:$0]  %s0, 128, %s20, [#allocation3], 64, 64, 4
    $region5: #{tpu_custom_call.1} parent=1 // pred_fallthru
      _
    // Predicated region
    $region6: #{tpu_custom_call.1} parent=1 // pred_check
      _
    $region7: #{tpu_custom_call.1} parent=1 // pred_check_branch
      %27 = sbr.rel (0) target = $region9
    $region8: #{tpu_custom_call.1} parent=1 // pred_region
      %s29 = ssub.s32 8192, 8192
      %30 = vsyncadd [#allocation6], %s29
      %s31 = sshll.u32 [#allocation5], 4
      %s32 = int_to_ptr.vmem [resolvable:$true] %s31
      %37 = dma.hbm_to_vmem [thread:$0]  %s1, 8192, %s32, [#allocation6], 64, 64, 4
    $region9: #{tpu_custom_call.1} parent=1 // pred_fallthru
      _
    // Predicated region
    $region10: #{tpu_custom_call.1} parent=1 // pred_check
      _
    $region11: #{tpu_custom_call.1} parent=1 // pred_check_branch
      %39 = sbr.rel (0) target = $region13
    $region12: #{tpu_custom_call.1} parent=1 // pred_region
      %s41 = ssub.s32 128, 128
      %42 = vsyncadd [#allocation6], %s41
      %s44 = sshll.u32 [#allocation7], 4
      %s45 = int_to_ptr.vmem [resolvable:$true] %s44
      %47 = dma.hbm_to_vmem [thread:$0]  %s2, 128, %s45, [#allocation6]
    $region13: #{tpu_custom_call.1} parent=1 // pred_fallthru
      _
    // Predicated region
    $region14: #{tpu_custom_call.1} parent=1 // pred_check
      _
    $region15: #{tpu_custom_call.1} parent=1 // pred_check_branch
      %49 = sbr.rel (0) target = $region17
    $region16: #{tpu_custom_call.1} parent=1 // pred_region
      %50 = dma.done [#allocation3], 128
    $region17: #{tpu_custom_call.1} parent=1 // pred_fallthru
      _
    // Predicated region
    $region18: #{tpu_custom_call.1} parent=1 // pred_check
      _
    $region19: #{tpu_custom_call.1} parent=1 // pred_check_branch
      %52 = sbr.rel (0) target = $region21
    $region20: #{tpu_custom_call.1} parent=1 // pred_region
      %53 = dma.done [#allocation6], 8192
    $region21: #{tpu_custom_call.1} parent=1 // pred_fallthru
      _
    // Predicated region
    $region22: #{tpu_custom_call.1} parent=1 // pred_check
      _
    $region23: #{tpu_custom_call.1} parent=1 // pred_check_branch
      %55 = sbr.rel (0) target = $region25
    $region24: #{tpu_custom_call.1} parent=1 // pred_region
      %56 = dma.done [#allocation6], 128
    $region25: #{tpu_custom_call.1} parent=1 // pred_fallthru
      _
    %v58 = vld [vmem:[#allocation2] sm:$0xf]
    %v59 = vld [vmem:[#allocation2 + $0x4] sm:$0xf]
    %v60 = vld [vmem:[#allocation7] sm:$0xff]
    %v61 = vld [vmem:[#allocation5] sm:$0xf]
    %v62 = vld [vmem:[#allocation5 + $0x4] sm:$0xf]
    %v63 = vld [vmem:[#allocation5 + $0x8] sm:$0xf]
    %v64 = vld [vmem:[#allocation5 + $0xc] sm:$0xf]
    %v65 = vld [vmem:[#allocation5 + $0x10] sm:$0xf]
    %v66 = vld [vmem:[#allocation5 + $0x14] sm:$0xf]
    %v67 = vld [vmem:[#allocation5 + $0x18] sm:$0xf]
    %v68 = vld [vmem:[#allocation5 + $0x1c] sm:$0xf]
    %v69 = vld [vmem:[#allocation5 + $0x20] sm:$0xf]
    %v70 = vld [vmem:[#allocation5 + $0x24] sm:$0xf]
    %v71 = vld [vmem:[#allocation5 + $0x28] sm:$0xf]
    %v72 = vld [vmem:[#allocation5 + $0x2c] sm:$0xf]
    %v73 = vld [vmem:[#allocation5 + $0x30] sm:$0xf]
    %v74 = vld [vmem:[#allocation5 + $0x34] sm:$0xf]
    %v75 = vld [vmem:[#allocation5 + $0x38] sm:$0xf]
    %v76 = vld [vmem:[#allocation5 + $0x3c] sm:$0xf]
    %v77 = vlaneseq
    %v78 = vshrl.u32 %v77, 7
    %v79 = vsub.s32 0, %v78
    %v80 = vrot.slane %v60, %v79
    %v83 = vunpack.c.l.b16 %v58
    %v84 = vunpack.c.l.b16 %v59
    %v85 = vpack.c.b16 %v84, %v83
    %v103 = vunpack.c.l.b16 %v61
    %v104 = vunpack.c.l.b16 %v62
    %v105 = vunpack.c.l.b16 %v63
    %v106 = vunpack.c.l.b16 %v64
    %v107 = vunpack.c.l.b16 %v65
    %v108 = vunpack.c.l.b16 %v66
    %v109 = vunpack.c.l.b16 %v67
    %v110 = vunpack.c.l.b16 %v68
    %v111 = vunpack.c.l.b16 %v69
    %v112 = vunpack.c.l.b16 %v70
    %v113 = vunpack.c.l.b16 %v71
    %v114 = vunpack.c.l.b16 %v72
    %v115 = vunpack.c.l.b16 %v73
    %v116 = vunpack.c.l.b16 %v74
    %v117 = vunpack.c.l.b16 %v75
    %v118 = vunpack.c.l.b16 %v76
    %v119 = vpack.c.b16 %v104, %v103
    %v120 = vpack.c.b16 %v106, %v105
    %v121 = vpack.c.b16 %v108, %v107
    %v122 = vpack.c.b16 %v110, %v109
    %v123 = vpack.c.b16 %v112, %v111
    %v124 = vpack.c.b16 %v114, %v113
    %v125 = vpack.c.b16 %v116, %v115
    %v126 = vpack.c.b16 %v118, %v117
    %135 = vmatprep.subr.bf16.mxu0 0
    %136 = vmatpush1.bf16.msra.mxu0 %v119
    %137 = vmatprep.subr.bf16.mxu0 0
    %138 = vmatpush1.bf16.msra.mxu0 %v120
    %139 = vmatprep.subr.bf16.mxu0 0
    %140 = vmatpush1.bf16.msra.mxu0 %v121
    %141 = vmatprep.subr.bf16.mxu0 0
    %142 = vmatpush1.bf16.msra.mxu0 %v122
    %143 = vmatprep.subr.bf16.mxu0 0
    %144 = vmatpush1.bf16.msra.mxu0 %v123
    %145 = vmatprep.subr.bf16.mxu0 0
    %146 = vmatpush1.bf16.msra.mxu0 %v124
    %147 = vmatprep.subr.bf16.mxu0 0
    %148 = vmatpush1.bf16.msra.mxu0 %v125
    %149 = vmatprep.subr.bf16.mxu0 0
    %150 = vmatpush1.bf16.msra.mxu0 %v126
    %151 = vmatprep.subr.bf16.mxu0 0
    %152 = vmatpush1.bf16.msra.mxu0 0
    %153 = vmatprep.subr.bf16.mxu0 0
    %154 = vmatpush1.bf16.msra.mxu0 0
    %155 = vmatprep.subr.bf16.mxu0 0
    %156 = vmatpush1.bf16.msra.mxu0 0
    %157 = vmatprep.subr.bf16.mxu0 0
    %158 = vmatpush1.bf16.msra.mxu0 0
    %159 = vmatprep.subr.bf16.mxu0 0
    %160 = vmatpush1.bf16.msra.mxu0 0
    %161 = vmatprep.subr.bf16.mxu0 0
    %162 = vmatpush1.bf16.msra.mxu0 0
    %163 = vmatprep.subr.bf16.mxu0 0
    %164 = vmatpush1.bf16.msra.mxu0 0
    %165 = vmatprep.subr.bf16.mxu0 0
    %166 = vmatpush1.bf16.msra.mxu0 0
    %167 = vmatprep.mubr.bf16.mxu0 0
    %168 = vmatmul.mubr.bf16.gmra.mrb[0].mxu0 %v85
    %v169 = vpop.f32.mrb[0].mxu0
    %v170 = vadd.f32 %v80, %v169
    %v171 = vpop.f32.mrb[0].mxu0
    %v172 = vpop.f32.mrb[0].mxu0
    %v173 = vadd.f32 %v80, %v172
    %v174 = vpop.f32.mrb[0].mxu0
    %175 = vdwg.mxu0
    %v176 = vmax.f32 %v170, 0.0
    %v177 = vmax.f32 %v173, 0.0
    %v178 = vpack.c.bf16 %v177, %v176
    %s179 = scalar_lea.vmem [#allocation5], 64
    %v180 = vld [vmem:[%s179] sm:$0xf]
    %v181 = vld [vmem:[%s179 + $0x4] sm:$0xf]
    %v182 = vld [vmem:[%s179 + $0x8] sm:$0xf]
    %v183 = vld [vmem:[%s179 + $0xc] sm:$0xf]
    %v184 = vld [vmem:[%s179 + $0x10] sm:$0xf]
    %v185 = vld [vmem:[%s179 + $0x14] sm:$0xf]
    %v186 = vld [vmem:[%s179 + $0x18] sm:$0xf]
    %v187 = vld [vmem:[%s179 + $0x1c] sm:$0xf]
    %v188 = vld [vmem:[%s179 + $0x20] sm:$0xf]
    %v189 = vld [vmem:[%s179 + $0x24] sm:$0xf]
    %v190 = vld [vmem:[%s179 + $0x28] sm:$0xf]
    %v191 = vld [vmem:[%s179 + $0x2c] sm:$0xf]
    %v192 = vld [vmem:[%s179 + $0x30] sm:$0xf]
    %v193 = vld [vmem:[%s179 + $0x34] sm:$0xf]
    %v194 = vld [vmem:[%s179 + $0x38] sm:$0xf]
    %v195 = vld [vmem:[%s179 + $0x3c] sm:$0xf]
    %v196 = vlaneseq
    %v197 = vshrl.u32 %v196, 7
    %v198 = vsub.s32 1, %v197
    %v199 = vrot.slane %v60, %v198
    %v216 = vunpack.c.l.b16 %v180
    %v217 = vunpack.c.l.b16 %v181
    %v218 = vunpack.c.l.b16 %v182
    %v219 = vunpack.c.l.b16 %v183
    %v220 = vunpack.c.l.b16 %v184
    %v221 = vunpack.c.l.b16 %v185
    %v222 = vunpack.c.l.b16 %v186
    %v223 = vunpack.c.l.b16 %v187
    %v224 = vunpack.c.l.b16 %v188
    %v225 = vunpack.c.l.b16 %v189
    %v226 = vunpack.c.l.b16 %v190
    %v227 = vunpack.c.l.b16 %v191
    %v228 = vunpack.c.l.b16 %v192
    %v229 = vunpack.c.l.b16 %v193
    %v230 = vunpack.c.l.b16 %v194
    %v231 = vunpack.c.l.b16 %v195
    %v232 = vpack.c.b16 %v217, %v216
    %v233 = vpack.c.b16 %v219, %v218
    %v234 = vpack.c.b16 %v221, %v220
    %v235 = vpack.c.b16 %v223, %v222
    %v236 = vpack.c.b16 %v225, %v224
    %v237 = vpack.c.b16 %v227, %v226
    %v238 = vpack.c.b16 %v229, %v228
    %v239 = vpack.c.b16 %v231, %v230
    %248 = vmatprep.subr.bf16.mxu0 0
    %249 = vmatpush1.bf16.msra.mxu0 %v232
    %250 = vmatprep.subr.bf16.mxu0 0
    %251 = vmatpush1.bf16.msra.mxu0 %v233
    %252 = vmatprep.subr.bf16.mxu0 0
    %253 = vmatpush1.bf16.msra.mxu0 %v234
    %254 = vmatprep.subr.bf16.mxu0 0
    %255 = vmatpush1.bf16.msra.mxu0 %v235
    %256 = vmatprep.subr.bf16.mxu0 0
    %257 = vmatpush1.bf16.msra.mxu0 %v236
    %258 = vmatprep.subr.bf16.mxu0 0
    %259 = vmatpush1.bf16.msra.mxu0 %v237
    %260 = vmatprep.subr.bf16.mxu0 0
    %261 = vmatpush1.bf16.msra.mxu0 %v238
    %262 = vmatprep.subr.bf16.mxu0 0
    %263 = vmatpush1.bf16.msra.mxu0 %v239
    %264 = vmatprep.subr.bf16.mxu0 0
    %265 = vmatpush1.bf16.msra.mxu0 0
    %266 = vmatprep.subr.bf16.mxu0 0
    %267 = vmatpush1.bf16.msra.mxu0 0
    %268 = vmatprep.subr.bf16.mxu0 0
    %269 = vmatpush1.bf16.msra.mxu0 0
    %270 = vmatprep.subr.bf16.mxu0 0
    %271 = vmatpush1.bf16.msra.mxu0 0
    %272 = vmatprep.subr.bf16.mxu0 0
    %273 = vmatpush1.bf16.msra.mxu0 0
    %274 = vmatprep.subr.bf16.mxu0 0
    %275 = vmatpush1.bf16.msra.mxu0 0
    %276 = vmatprep.subr.bf16.mxu0 0
    %277 = vmatpush1.bf16.msra.mxu0 0
    %278 = vmatprep.subr.bf16.mxu0 0
    %279 = vmatpush1.bf16.msra.mxu0 0
    %280 = vmatprep.mubr.bf16.mxu0 0
    %281 = vmatmul.mubr.bf16.gmra.mrb[0].mxu0 %v178
    %v282 = vpop.f32.mrb[0].mxu0
    %v283 = vadd.f32 %v199, %v282
    %v284 = vpop.f32.mrb[0].mxu0
    %v285 = vpop.f32.mrb[0].mxu0
    %v286 = vadd.f32 %v199, %v285
    %v287 = vpop.f32.mrb[0].mxu0
    %288 = vdwg.mxu0
    %v289 = vmax.f32 %v283, 0.0
    %v290 = vmax.f32 %v286, 0.0
    %v291 = vpack.c.bf16 %v290, %v289
    %s292 = scalar_lea.vmem [#allocation5], 128
    %v293 = vld [vmem:[%s292] sm:$0xf]
    %v294 = vld [vmem:[%s292 + $0x4] sm:$0xf]
    %v295 = vld [vmem:[%s292 + $0x8] sm:$0xf]
    %v296 = vld [vmem:[%s292 + $0xc] sm:$0xf]
    %v297 = vld [vmem:[%s292 + $0x10] sm:$0xf]
    %v298 = vld [vmem:[%s292 + $0x14] sm:$0xf]
    %v299 = vld [vmem:[%s292 + $0x18] sm:$0xf]
    %v300 = vld [vmem:[%s292 + $0x1c] sm:$0xf]
    %v301 = vld [vmem:[%s292 + $0x20] sm:$0xf]
    %v302 = vld [vmem:[%s292 + $0x24] sm:$0xf]
    %v303 = vld [vmem:[%s292 + $0x28] sm:$0xf]
    %v304 = vld [vmem:[%s292 + $0x2c] sm:$0xf]
    %v305 = vld [vmem:[%s292 + $0x30] sm:$0xf]
    %v306 = vld [vmem:[%s292 + $0x34] sm:$0xf]
    %v307 = vld [vmem:[%s292 + $0x38] sm:$0xf]
    %v308 = vld [vmem:[%s292 + $0x3c] sm:$0xf]
    %v309 = vlaneseq
    %v310 = vshrl.u32 %v309, 7
    %v311 = vsub.s32 2, %v310
    %v312 = vrot.slane %v60, %v311
    %v329 = vunpack.c.l.b16 %v293
    %v330 = vunpack.c.l.b16 %v294
    %v331 = vunpack.c.l.b16 %v295
    %v332 = vunpack.c.l.b16 %v296
    %v333 = vunpack.c.l.b16 %v297
    %v334 = vunpack.c.l.b16 %v298
    %v335 = vunpack.c.l.b16 %v299
    %v336 = vunpack.c.l.b16 %v300
    %v337 = vunpack.c.l.b16 %v301
    %v338 = vunpack.c.l.b16 %v302
    %v339 = vunpack.c.l.b16 %v303
    %v340 = vunpack.c.l.b16 %v304
    %v341 = vunpack.c.l.b16 %v305
    %v342 = vunpack.c.l.b16 %v306
    %v343 = vunpack.c.l.b16 %v307
    %v344 = vunpack.c.l.b16 %v308
    %v345 = vpack.c.b16 %v330, %v329
    %v346 = vpack.c.b16 %v332, %v331
    %v347 = vpack.c.b16 %v334, %v333
    %v348 = vpack.c.b16 %v336, %v335
    %v349 = vpack.c.b16 %v338, %v337
    %v350 = vpack.c.b16 %v340, %v339
    %v351 = vpack.c.b16 %v342, %v341
    %v352 = vpack.c.b16 %v344, %v343
    %361 = vmatprep.subr.bf16.mxu0 0
    %362 = vmatpush1.bf16.msra.mxu0 %v345
    %363 = vmatprep.subr.bf16.mxu0 0
    %364 = vmatpush1.bf16.msra.mxu0 %v346
    %365 = vmatprep.subr.bf16.mxu0 0
    %366 = vmatpush1.bf16.msra.mxu0 %v347
    %367 = vmatprep.subr.bf16.mxu0 0
    %368 = vmatpush1.bf16.msra.mxu0 %v348
    %369 = vmatprep.subr.bf16.mxu0 0
    %370 = vmatpush1.bf16.msra.mxu0 %v349
    %371 = vmatprep.subr.bf16.mxu0 0
    %372 = vmatpush1.bf16.msra.mxu0 %v350
    %373 = vmatprep.subr.bf16.mxu0 0
    %374 = vmatpush1.bf16.msra.mxu0 %v351
    %375 = vmatprep.subr.bf16.mxu0 0
    %376 = vmatpush1.bf16.msra.mxu0 %v352
    %377 = vmatprep.subr.bf16.mxu0 0
    %378 = vmatpush1.bf16.msra.mxu0 0
    %379 = vmatprep.subr.bf16.mxu0 0
    %380 = vmatpush1.bf16.msra.mxu0 0
    %381 = vmatprep.subr.bf16.mxu0 0
    %382 = vmatpush1.bf16.msra.mxu0 0
    %383 = vmatprep.subr.bf16.mxu0 0
    %384 = vmatpush1.bf16.msra.mxu0 0
    %385 = vmatprep.subr.bf16.mxu0 0
    %386 = vmatpush1.bf16.msra.mxu0 0
    %387 = vmatprep.subr.bf16.mxu0 0
    %388 = vmatpush1.bf16.msra.mxu0 0
    %389 = vmatprep.subr.bf16.mxu0 0
    %390 = vmatpush1.bf16.msra.mxu0 0
    %391 = vmatprep.subr.bf16.mxu0 0
    %392 = vmatpush1.bf16.msra.mxu0 0
    %393 = vmatprep.mubr.bf16.mxu0 0
    %394 = vmatmul.mubr.bf16.gmra.mrb[0].mxu0 %v291
    %v395 = vpop.f32.mrb[0].mxu0
    %v396 = vadd.f32 %v312, %v395
    %v397 = vpop.f32.mrb[0].mxu0
    %v398 = vpop.f32.mrb[0].mxu0
    %v399 = vadd.f32 %v312, %v398
    %v400 = vpop.f32.mrb[0].mxu0
    %401 = vdwg.mxu0
    %v402 = vmax.f32 %v396, 0.0
    %v403 = vmax.f32 %v399, 0.0
    %v404 = vpack.c.bf16 %v403, %v402
    %s405 = scalar_lea.vmem [#allocation5], 192
    %v406 = vld [vmem:[%s405] sm:$0xf]
    %v407 = vld [vmem:[%s405 + $0x4] sm:$0xf]
    %v408 = vld [vmem:[%s405 + $0x8] sm:$0xf]
    %v409 = vld [vmem:[%s405 + $0xc] sm:$0xf]
    %v410 = vld [vmem:[%s405 + $0x10] sm:$0xf]
    %v411 = vld [vmem:[%s405 + $0x14] sm:$0xf]
    %v412 = vld [vmem:[%s405 + $0x18] sm:$0xf]
    %v413 = vld [vmem:[%s405 + $0x1c] sm:$0xf]
    %v414 = vld [vmem:[%s405 + $0x20] sm:$0xf]
    %v415 = vld [vmem:[%s405 + $0x24] sm:$0xf]
    %v416 = vld [vmem:[%s405 + $0x28] sm:$0xf]
    %v417 = vld [vmem:[%s405 + $0x2c] sm:$0xf]
    %v418 = vld [vmem:[%s405 + $0x30] sm:$0xf]
    %v419 = vld [vmem:[%s405 + $0x34] sm:$0xf]
    %v420 = vld [vmem:[%s405 + $0x38] sm:$0xf]
    %v421 = vld [vmem:[%s405 + $0x3c] sm:$0xf]
    %v422 = vlaneseq
    %v423 = vshrl.u32 %v422, 7
    %v424 = vsub.s32 3, %v423
    %v425 = vrot.slane %v60, %v424
    %v442 = vunpack.c.l.b16 %v406
    %v443 = vunpack.c.l.b16 %v407
    %v444 = vunpack.c.l.b16 %v408
    %v445 = vunpack.c.l.b16 %v409
    %v446 = vunpack.c.l.b16 %v410
    %v447 = vunpack.c.l.b16 %v411
    %v448 = vunpack.c.l.b16 %v412
    %v449 = vunpack.c.l.b16 %v413
    %v450 = vunpack.c.l.b16 %v414
    %v451 = vunpack.c.l.b16 %v415
    %v452 = vunpack.c.l.b16 %v416
    %v453 = vunpack.c.l.b16 %v417
    %v454 = vunpack.c.l.b16 %v418
    %v455 = vunpack.c.l.b16 %v419
    %v456 = vunpack.c.l.b16 %v420
    %v457 = vunpack.c.l.b16 %v421
    %v458 = vpack.c.b16 %v443, %v442
    %v459 = vpack.c.b16 %v445, %v444
    %v460 = vpack.c.b16 %v447, %v446
    %v461 = vpack.c.b16 %v449, %v448
    %v462 = vpack.c.b16 %v451, %v450
    %v463 = vpack.c.b16 %v453, %v452
    %v464 = vpack.c.b16 %v455, %v454
    %v465 = vpack.c.b16 %v457, %v456
    %474 = vmatprep.subr.bf16.mxu0 0
    %475 = vmatpush1.bf16.msra.mxu0 %v458
    %476 = vmatprep.subr.bf16.mxu0 0
    %477 = vmatpush1.bf16.msra.mxu0 %v459
    %478 = vmatprep.subr.bf16.mxu0 0
    %479 = vmatpush1.bf16.msra.mxu0 %v460
    %480 = vmatprep.subr.bf16.mxu0 0
    %481 = vmatpush1.bf16.msra.mxu0 %v461
    %482 = vmatprep.subr.bf16.mxu0 0
    %483 = vmatpush1.bf16.msra.mxu0 %v462
    %484 = vmatprep.subr.bf16.mxu0 0
    %485 = vmatpush1.bf16.msra.mxu0 %v463
    %486 = vmatprep.subr.bf16.mxu0 0
    %487 = vmatpush1.bf16.msra.mxu0 %v464
    %488 = vmatprep.subr.bf16.mxu0 0
    %489 = vmatpush1.bf16.msra.mxu0 %v465
    %490 = vmatprep.subr.bf16.mxu0 0
    %491 = vmatpush1.bf16.msra.mxu0 0
    %492 = vmatprep.subr.bf16.mxu0 0
    %493 = vmatpush1.bf16.msra.mxu0 0
    %494 = vmatprep.subr.bf16.mxu0 0
    %495 = vmatpush1.bf16.msra.mxu0 0
    %496 = vmatprep.subr.bf16.mxu0 0
    %497 = vmatpush1.bf16.msra.mxu0 0
    %498 = vmatprep.subr.bf16.mxu0 0
    %499 = vmatpush1.bf16.msra.mxu0 0
    %500 = vmatprep.subr.bf16.mxu0 0
    %501 = vmatpush1.bf16.msra.mxu0 0
    %502 = vmatprep.subr.bf16.mxu0 0
    %503 = vmatpush1.bf16.msra.mxu0 0
    %504 = vmatprep.subr.bf16.mxu0 0
    %505 = vmatpush1.bf16.msra.mxu0 0
    %506 = vmatprep.mubr.bf16.mxu0 0
    %507 = vmatmul.mubr.bf16.gmra.mrb[0].mxu0 %v404
    %v508 = vpop.f32.mrb[0].mxu0
    %v509 = vadd.f32 %v425, %v508
    %v510 = vpop.f32.mrb[0].mxu0
    %v511 = vpop.f32.mrb[0].mxu0
    %v512 = vadd.f32 %v425, %v511
    %v513 = vpop.f32.mrb[0].mxu0
    %514 = vdwg.mxu0
    %v515 = vtanh.pop %v509
    %v516 = vtanh.pop %v512
    %517 = vst [vmem:[#allocation8] sm:$0xff] %v515
    %518 = vst [vmem:[#allocation8 + $0x8] sm:$0xff] %v516
    %v519 = vpack.c.bf16 %v516, %v515
    %s520 = scalar_lea.vmem [#allocation5], 256
    %v521 = vld [vmem:[%s520] sm:$0xf]
    %v522 = vld [vmem:[%s520 + $0x4] sm:$0xf]
    %v523 = vld [vmem:[%s520 + $0x8] sm:$0xf]
    %v524 = vld [vmem:[%s520 + $0xc] sm:$0xf]
    %v525 = vld [vmem:[%s520 + $0x10] sm:$0xf]
    %v526 = vld [vmem:[%s520 + $0x14] sm:$0xf]
    %v527 = vld [vmem:[%s520 + $0x18] sm:$0xf]
    %v528 = vld [vmem:[%s520 + $0x1c] sm:$0xf]
    %v529 = vld [vmem:[%s520 + $0x20] sm:$0xf]
    %v530 = vld [vmem:[%s520 + $0x24] sm:$0xf]
    %v531 = vld [vmem:[%s520 + $0x28] sm:$0xf]
    %v532 = vld [vmem:[%s520 + $0x2c] sm:$0xf]
    %v533 = vld [vmem:[%s520 + $0x30] sm:$0xf]
    %v534 = vld [vmem:[%s520 + $0x34] sm:$0xf]
    %v535 = vld [vmem:[%s520 + $0x38] sm:$0xf]
    %v536 = vld [vmem:[%s520 + $0x3c] sm:$0xf]
    %v537 = vlaneseq
    %v538 = vshrl.u32 %v537, 7
    %v539 = vsub.s32 4, %v538
    %v540 = vrot.slane %v60, %v539
    %v557 = vunpack.c.l.b16 %v521
    %v558 = vunpack.c.l.b16 %v522
    %v559 = vunpack.c.l.b16 %v523
    %v560 = vunpack.c.l.b16 %v524
    %v561 = vunpack.c.l.b16 %v525
    %v562 = vunpack.c.l.b16 %v526
    %v563 = vunpack.c.l.b16 %v527
    %v564 = vunpack.c.l.b16 %v528
    %v565 = vunpack.c.l.b16 %v529
    %v566 = vunpack.c.l.b16 %v530
    %v567 = vunpack.c.l.b16 %v531
    %v568 = vunpack.c.l.b16 %v532
    %v569 = vunpack.c.l.b16 %v533
    %v570 = vunpack.c.l.b16 %v534
    %v571 = vunpack.c.l.b16 %v535
    %v572 = vunpack.c.l.b16 %v536
    %v573 = vpack.c.b16 %v558, %v557
    %v574 = vpack.c.b16 %v560, %v559
    %v575 = vpack.c.b16 %v562, %v561
    %v576 = vpack.c.b16 %v564, %v563
    %v577 = vpack.c.b16 %v566, %v565
    %v578 = vpack.c.b16 %v568, %v567
    %v579 = vpack.c.b16 %v570, %v569
    %v580 = vpack.c.b16 %v572, %v571
    %589 = vmatprep.subr.bf16.mxu0 0
    %590 = vmatpush1.bf16.msra.mxu0 %v573
    %591 = vmatprep.subr.bf16.mxu0 0
    %592 = vmatpush1.bf16.msra.mxu0 %v574
    %593 = vmatprep.subr.bf16.mxu0 0
    %594 = vmatpush1.bf16.msra.mxu0 %v575
    %595 = vmatprep.subr.bf16.mxu0 0
    %596 = vmatpush1.bf16.msra.mxu0 %v576
    %597 = vmatprep.subr.bf16.mxu0 0
    %598 = vmatpush1.bf16.msra.mxu0 %v577
    %599 = vmatprep.subr.bf16.mxu0 0
    %600 = vmatpush1.bf16.msra.mxu0 %v578
    %601 = vmatprep.subr.bf16.mxu0 0
    %602 = vmatpush1.bf16.msra.mxu0 %v579
    %603 = vmatprep.subr.bf16.mxu0 0
    %604 = vmatpush1.bf16.msra.mxu0 %v580
    %605 = vmatprep.subr.bf16.mxu0 0
    %606 = vmatpush1.bf16.msra.mxu0 0
    %607 = vmatprep.subr.bf16.mxu0 0
    %608 = vmatpush1.bf16.msra.mxu0 0
    %609 = vmatprep.subr.bf16.mxu0 0
    %610 = vmatpush1.bf16.msra.mxu0 0
    %611 = vmatprep.subr.bf16.mxu0 0
    %612 = vmatpush1.bf16.msra.mxu0 0
    %613 = vmatprep.subr.bf16.mxu0 0
    %614 = vmatpush1.bf16.msra.mxu0 0
    %615 = vmatprep.subr.bf16.mxu0 0
    %616 = vmatpush1.bf16.msra.mxu0 0
    %617 = vmatprep.subr.bf16.mxu0 0
    %618 = vmatpush1.bf16.msra.mxu0 0
    %619 = vmatprep.subr.bf16.mxu0 0
    %620 = vmatpush1.bf16.msra.mxu0 0
    %621 = vmatprep.mubr.bf16.mxu0 0
    %622 = vmatmul.mubr.bf16.gmra.mrb[0].mxu0 %v519
    %v623 = vpop.f32.mrb[0].mxu0
    %v624 = vadd.f32 %v540, %v623
    %v625 = vpop.f32.mrb[0].mxu0
    %v626 = vpop.f32.mrb[0].mxu0
    %v627 = vadd.f32 %v540, %v626
    %v628 = vpop.f32.mrb[0].mxu0
    %629 = vdwg.mxu0
    %v630 = vmax.f32 %v624, 0.0
    %v631 = vmax.f32 %v627, 0.0
    %v632 = vpack.c.bf16 %v631, %v630
    %s633 = scalar_lea.vmem [#allocation5], 320
    %v634 = vld [vmem:[%s633] sm:$0xf]
    %v635 = vld [vmem:[%s633 + $0x4] sm:$0xf]
    %v636 = vld [vmem:[%s633 + $0x8] sm:$0xf]
    %v637 = vld [vmem:[%s633 + $0xc] sm:$0xf]
    %v638 = vld [vmem:[%s633 + $0x10] sm:$0xf]
    %v639 = vld [vmem:[%s633 + $0x14] sm:$0xf]
    %v640 = vld [vmem:[%s633 + $0x18] sm:$0xf]
    %v641 = vld [vmem:[%s633 + $0x1c] sm:$0xf]
    %v642 = vld [vmem:[%s633 + $0x20] sm:$0xf]
    %v643 = vld [vmem:[%s633 + $0x24] sm:$0xf]
    %v644 = vld [vmem:[%s633 + $0x28] sm:$0xf]
    %v645 = vld [vmem:[%s633 + $0x2c] sm:$0xf]
    %v646 = vld [vmem:[%s633 + $0x30] sm:$0xf]
    %v647 = vld [vmem:[%s633 + $0x34] sm:$0xf]
    %v648 = vld [vmem:[%s633 + $0x38] sm:$0xf]
    %v649 = vld [vmem:[%s633 + $0x3c] sm:$0xf]
    %v650 = vlaneseq
    %v651 = vshrl.u32 %v650, 7
    %v652 = vsub.s32 5, %v651
    %v653 = vrot.slane %v60, %v652
    %v670 = vunpack.c.l.b16 %v634
    %v671 = vunpack.c.l.b16 %v635
    %v672 = vunpack.c.l.b16 %v636
    %v673 = vunpack.c.l.b16 %v637
    %v674 = vunpack.c.l.b16 %v638
    %v675 = vunpack.c.l.b16 %v639
    %v676 = vunpack.c.l.b16 %v640
    %v677 = vunpack.c.l.b16 %v641
    %v678 = vunpack.c.l.b16 %v642
    %v679 = vunpack.c.l.b16 %v643
    %v680 = vunpack.c.l.b16 %v644
    %v681 = vunpack.c.l.b16 %v645
    %v682 = vunpack.c.l.b16 %v646
    %v683 = vunpack.c.l.b16 %v647
    %v684 = vunpack.c.l.b16 %v648
    %v685 = vunpack.c.l.b16 %v649
    %v686 = vpack.c.b16 %v671, %v670
    %v687 = vpack.c.b16 %v673, %v672
    %v688 = vpack.c.b16 %v675, %v674
    %v689 = vpack.c.b16 %v677, %v676
    %v690 = vpack.c.b16 %v679, %v678
    %v691 = vpack.c.b16 %v681, %v680
    %v692 = vpack.c.b16 %v683, %v682
    %v693 = vpack.c.b16 %v685, %v684
    %702 = vmatprep.subr.bf16.mxu0 0
    %703 = vmatpush1.bf16.msra.mxu0 %v686
    %704 = vmatprep.subr.bf16.mxu0 0
    %705 = vmatpush1.bf16.msra.mxu0 %v687
    %706 = vmatprep.subr.bf16.mxu0 0
    %707 = vmatpush1.bf16.msra.mxu0 %v688
    %708 = vmatprep.subr.bf16.mxu0 0
    %709 = vmatpush1.bf16.msra.mxu0 %v689
    %710 = vmatprep.subr.bf16.mxu0 0
    %711 = vmatpush1.bf16.msra.mxu0 %v690
    %712 = vmatprep.subr.bf16.mxu0 0
    %713 = vmatpush1.bf16.msra.mxu0 %v691
    %714 = vmatprep.subr.bf16.mxu0 0
    %715 = vmatpush1.bf16.msra.mxu0 %v692
    %716 = vmatprep.subr.bf16.mxu0 0
    %717 = vmatpush1.bf16.msra.mxu0 %v693
    %718 = vmatprep.subr.bf16.mxu0 0
    %719 = vmatpush1.bf16.msra.mxu0 0
    %720 = vmatprep.subr.bf16.mxu0 0
    %721 = vmatpush1.bf16.msra.mxu0 0
    %722 = vmatprep.subr.bf16.mxu0 0
    %723 = vmatpush1.bf16.msra.mxu0 0
    %724 = vmatprep.subr.bf16.mxu0 0
    %725 = vmatpush1.bf16.msra.mxu0 0
    %726 = vmatprep.subr.bf16.mxu0 0
    %727 = vmatpush1.bf16.msra.mxu0 0
    %728 = vmatprep.subr.bf16.mxu0 0
    %729 = vmatpush1.bf16.msra.mxu0 0
    %730 = vmatprep.subr.bf16.mxu0 0
    %731 = vmatpush1.bf16.msra.mxu0 0
    %732 = vmatprep.subr.bf16.mxu0 0
    %733 = vmatpush1.bf16.msra.mxu0 0
    %734 = vmatprep.mubr.bf16.mxu0 0
    %735 = vmatmul.mubr.bf16.gmra.mrb[0].mxu0 %v632
    %v736 = vpop.f32.mrb[0].mxu0
    %v737 = vadd.f32 %v653, %v736
    %v738 = vpop.f32.mrb[0].mxu0
    %v739 = vpop.f32.mrb[0].mxu0
    %v740 = vadd.f32 %v653, %v739
    %v741 = vpop.f32.mrb[0].mxu0
    %742 = vdwg.mxu0
    %v743 = vmax.f32 %v737, 0.0
    %v744 = vmax.f32 %v740, 0.0
    %v745 = vpack.c.bf16 %v744, %v743
    %s746 = scalar_lea.vmem [#allocation5], 384
    %v747 = vld [vmem:[%s746] sm:$0xf]
    %v748 = vld [vmem:[%s746 + $0x4] sm:$0xf]
    %v749 = vld [vmem:[%s746 + $0x8] sm:$0xf]
    %v750 = vld [vmem:[%s746 + $0xc] sm:$0xf]
    %v751 = vld [vmem:[%s746 + $0x10] sm:$0xf]
    %v752 = vld [vmem:[%s746 + $0x14] sm:$0xf]
    %v753 = vld [vmem:[%s746 + $0x18] sm:$0xf]
    %v754 = vld [vmem:[%s746 + $0x1c] sm:$0xf]
    %v755 = vld [vmem:[%s746 + $0x20] sm:$0xf]
    %v756 = vld [vmem:[%s746 + $0x24] sm:$0xf]
    %v757 = vld [vmem:[%s746 + $0x28] sm:$0xf]
    %v758 = vld [vmem:[%s746 + $0x2c] sm:$0xf]
    %v759 = vld [vmem:[%s746 + $0x30] sm:$0xf]
    %v760 = vld [vmem:[%s746 + $0x34] sm:$0xf]
    %v761 = vld [vmem:[%s746 + $0x38] sm:$0xf]
    %v762 = vld [vmem:[%s746 + $0x3c] sm:$0xf]
    %v763 = vlaneseq
    %v764 = vshrl.u32 %v763, 7
    %v765 = vsub.s32 6, %v764
    %v766 = vrot.slane %v60, %v765
    %v783 = vunpack.c.l.b16 %v747
    %v784 = vunpack.c.l.b16 %v748
    %v785 = vunpack.c.l.b16 %v749
    %v786 = vunpack.c.l.b16 %v750
    %v787 = vunpack.c.l.b16 %v751
    %v788 = vunpack.c.l.b16 %v752
    %v789 = vunpack.c.l.b16 %v753
    %v790 = vunpack.c.l.b16 %v754
    %v791 = vunpack.c.l.b16 %v755
    %v792 = vunpack.c.l.b16 %v756
    %v793 = vunpack.c.l.b16 %v757
    %v794 = vunpack.c.l.b16 %v758
    %v795 = vunpack.c.l.b16 %v759
    %v796 = vunpack.c.l.b16 %v760
    %v797 = vunpack.c.l.b16 %v761
    %v798 = vunpack.c.l.b16 %v762
    %v799 = vpack.c.b16 %v784, %v783
    %v800 = vpack.c.b16 %v786, %v785
    %v801 = vpack.c.b16 %v788, %v787
    %v802 = vpack.c.b16 %v790, %v789
    %v803 = vpack.c.b16 %v792, %v791
    %v804 = vpack.c.b16 %v794, %v793
    %v805 = vpack.c.b16 %v796, %v795
    %v806 = vpack.c.b16 %v798, %v797
    %815 = vmatprep.subr.bf16.mxu0 0
    %816 = vmatpush1.bf16.msra.mxu0 %v799
    %817 = vmatprep.subr.bf16.mxu0 0
    %818 = vmatpush1.bf16.msra.mxu0 %v800
    %819 = vmatprep.subr.bf16.mxu0 0
    %820 = vmatpush1.bf16.msra.mxu0 %v801
    %821 = vmatprep.subr.bf16.mxu0 0
    %822 = vmatpush1.bf16.msra.mxu0 %v802
    %823 = vmatprep.subr.bf16.mxu0 0
    %824 = vmatpush1.bf16.msra.mxu0 %v803
    %825 = vmatprep.subr.bf16.mxu0 0
    %826 = vmatpush1.bf16.msra.mxu0 %v804
    %827 = vmatprep.subr.bf16.mxu0 0
    %828 = vmatpush1.bf16.msra.mxu0 %v805
    %829 = vmatprep.subr.bf16.mxu0 0
    %830 = vmatpush1.bf16.msra.mxu0 %v806
    %831 = vmatprep.subr.bf16.mxu0 0
    %832 = vmatpush1.bf16.msra.mxu0 0
    %833 = vmatprep.subr.bf16.mxu0 0
    %834 = vmatpush1.bf16.msra.mxu0 0
    %835 = vmatprep.subr.bf16.mxu0 0
    %836 = vmatpush1.bf16.msra.mxu0 0
    %837 = vmatprep.subr.bf16.mxu0 0
    %838 = vmatpush1.bf16.msra.mxu0 0
    %839 = vmatprep.subr.bf16.mxu0 0
    %840 = vmatpush1.bf16.msra.mxu0 0
    %841 = vmatprep.subr.bf16.mxu0 0
    %842 = vmatpush1.bf16.msra.mxu0 0
    %843 = vmatprep.subr.bf16.mxu0 0
    %844 = vmatpush1.bf16.msra.mxu0 0
    %845 = vmatprep.subr.bf16.mxu0 0
    %846 = vmatpush1.bf16.msra.mxu0 0
    %847 = vmatprep.mubr.bf16.mxu0 0
    %848 = vmatmul.mubr.bf16.gmra.mrb[0].mxu0 %v745
    %v849 = vpop.f32.mrb[0].mxu0
    %v850 = vadd.f32 %v766, %v849
    %v851 = vpop.f32.mrb[0].mxu0
    %v852 = vpop.f32.mrb[0].mxu0
    %v853 = vadd.f32 %v766, %v852
    %v854 = vpop.f32.mrb[0].mxu0
    %855 = vdwg.mxu0
    %v856 = vmax.f32 %v850, 0.0
    %v857 = vmax.f32 %v853, 0.0
    %v858 = vpack.c.bf16 %v857, %v856
    %s859 = scalar_lea.vmem [#allocation5], 448
    %v860 = vld [vmem:[%s859] sm:$0xf]
    %v861 = vld [vmem:[%s859 + $0x4] sm:$0xf]
    %v862 = vld [vmem:[%s859 + $0x8] sm:$0xf]
    %v863 = vld [vmem:[%s859 + $0xc] sm:$0xf]
    %v864 = vld [vmem:[%s859 + $0x10] sm:$0xf]
    %v865 = vld [vmem:[%s859 + $0x14] sm:$0xf]
    %v866 = vld [vmem:[%s859 + $0x18] sm:$0xf]
    %v867 = vld [vmem:[%s859 + $0x1c] sm:$0xf]
    %v868 = vld [vmem:[%s859 + $0x20] sm:$0xf]
    %v869 = vld [vmem:[%s859 + $0x24] sm:$0xf]
    %v870 = vld [vmem:[%s859 + $0x28] sm:$0xf]
    %v871 = vld [vmem:[%s859 + $0x2c] sm:$0xf]
    %v872 = vld [vmem:[%s859 + $0x30] sm:$0xf]
    %v873 = vld [vmem:[%s859 + $0x34] sm:$0xf]
    %v874 = vld [vmem:[%s859 + $0x38] sm:$0xf]
    %v875 = vld [vmem:[%s859 + $0x3c] sm:$0xf]
    %v876 = vlaneseq
    %v877 = vshrl.u32 %v876, 7
    %v878 = vsub.s32 7, %v877
    %v879 = vrot.slane %v60, %v878
    %v896 = vunpack.c.l.b16 %v860
    %v897 = vunpack.c.l.b16 %v861
    %v898 = vunpack.c.l.b16 %v862
    %v899 = vunpack.c.l.b16 %v863
    %v900 = vunpack.c.l.b16 %v864
    %v901 = vunpack.c.l.b16 %v865
    %v902 = vunpack.c.l.b16 %v866
    %v903 = vunpack.c.l.b16 %v867
    %v904 = vunpack.c.l.b16 %v868
    %v905 = vunpack.c.l.b16 %v869
    %v906 = vunpack.c.l.b16 %v870
    %v907 = vunpack.c.l.b16 %v871
    %v908 = vunpack.c.l.b16 %v872
    %v909 = vunpack.c.l.b16 %v873
    %v910 = vunpack.c.l.b16 %v874
    %v911 = vunpack.c.l.b16 %v875
    %v912 = vpack.c.b16 %v897, %v896
    %v913 = vpack.c.b16 %v899, %v898
    %v914 = vpack.c.b16 %v901, %v900
    %v915 = vpack.c.b16 %v903, %v902
    %v916 = vpack.c.b16 %v905, %v904
    %v917 = vpack.c.b16 %v907, %v906
    %v918 = vpack.c.b16 %v909, %v908
    %v919 = vpack.c.b16 %v911, %v910
    %928 = vmatprep.subr.bf16.mxu0 0
    %929 = vmatpush1.bf16.msra.mxu0 %v912
    %930 = vmatprep.subr.bf16.mxu0 0
    %931 = vmatpush1.bf16.msra.mxu0 %v913
    %932 = vmatprep.subr.bf16.mxu0 0
    %933 = vmatpush1.bf16.msra.mxu0 %v914
    %934 = vmatprep.subr.bf16.mxu0 0
    %935 = vmatpush1.bf16.msra.mxu0 %v915
    %936 = vmatprep.subr.bf16.mxu0 0
    %937 = vmatpush1.bf16.msra.mxu0 %v916
    %938 = vmatprep.subr.bf16.mxu0 0
    %939 = vmatpush1.bf16.msra.mxu0 %v917
    %940 = vmatprep.subr.bf16.mxu0 0
    %941 = vmatpush1.bf16.msra.mxu0 %v918
    %942 = vmatprep.subr.bf16.mxu0 0
    %943 = vmatpush1.bf16.msra.mxu0 %v919
    %944 = vmatprep.subr.bf16.mxu0 0
    %945 = vmatpush1.bf16.msra.mxu0 0
    %946 = vmatprep.subr.bf16.mxu0 0
    %947 = vmatpush1.bf16.msra.mxu0 0
    %948 = vmatprep.subr.bf16.mxu0 0
    %949 = vmatpush1.bf16.msra.mxu0 0
    %950 = vmatprep.subr.bf16.mxu0 0
    %951 = vmatpush1.bf16.msra.mxu0 0
    %952 = vmatprep.subr.bf16.mxu0 0
    %953 = vmatpush1.bf16.msra.mxu0 0
    %954 = vmatprep.subr.bf16.mxu0 0
    %955 = vmatpush1.bf16.msra.mxu0 0
    %956 = vmatprep.subr.bf16.mxu0 0
    %957 = vmatpush1.bf16.msra.mxu0 0
    %958 = vmatprep.subr.bf16.mxu0 0
    %959 = vmatpush1.bf16.msra.mxu0 0
    %960 = vmatprep.mubr.bf16.mxu0 0
    %961 = vmatmul.mubr.bf16.gmra.mrb[0].mxu0 %v858
    %v962 = vpop.f32.mrb[0].mxu0
    %v963 = vadd.f32 %v879, %v962
    %v964 = vpop.f32.mrb[0].mxu0
    %v965 = vpop.f32.mrb[0].mxu0
    %v966 = vadd.f32 %v879, %v965
    %v967 = vpop.f32.mrb[0].mxu0
    %968 = vdwg.mxu0
    %969 = vst [vmem:[#allocation9] sm:$0xff] %v963
    %970 = vst [vmem:[#allocation9 + $0x8] sm:$0xff] %v966
    // Predicated region
    $region26: #{tpu_custom_call.1} parent=1 // pred_check
      _
    $region27: #{tpu_custom_call.1} parent=1 // pred_check_branch
      %972 = sbr.rel (0) target = $region29
    $region28: #{tpu_custom_call.1} parent=1 // pred_region
      %s974 = ssub.s32 256, 256
      %975 = vsyncadd [#allocation4], %s974
      %s976 = sshll.u32 [#allocation8], 4
      %s977 = int_to_ptr.vmem [resolvable:$true] %s976
      %982 = dma.vmem_to_hbm [thread:$0]  %s977, 256, %s3, [#allocation4], 128, 128, 8
    $region29: #{tpu_custom_call.1} parent=1 // pred_fallthru
      _
    // Predicated region
    $region30: #{tpu_custom_call.1} parent=1 // pred_check
      _
    $region31: #{tpu_custom_call.1} parent=1 // pred_check_branch
      %984 = sbr.rel (0) target = $region33
    $region32: #{tpu_custom_call.1} parent=1 // pred_region
      %s986 = ssub.s32 256, 256
      %987 = vsyncadd [#allocation10], %s986
      %s988 = sshll.u32 [#allocation9], 4
      %s989 = int_to_ptr.vmem [resolvable:$true] %s988
      %994 = dma.vmem_to_hbm [thread:$0]  %s989, 256, %s4, [#allocation10], 128, 128, 8
    $region33: #{tpu_custom_call.1} parent=1 // pred_fallthru
      _
    // Predicated region
    $region34: #{tpu_custom_call.1} parent=1 // pred_check
      _
    $region35: #{tpu_custom_call.1} parent=1 // pred_check_branch
      %996 = sbr.rel (0) target = $region37
    $region36: #{tpu_custom_call.1} parent=1 // pred_region
      %997 = dma.done [#allocation4], 256
    $region37: #{tpu_custom_call.1} parent=1 // pred_fallthru
      _
    // Predicated region
    $region38: #{tpu_custom_call.1} parent=1 // pred_check
      _
    $region39: #{tpu_custom_call.1} parent=1 // pred_check_branch
      %999 = sbr.rel (0) target = $region41
    $region40: #{tpu_custom_call.1} parent=1 // pred_region
      %1000 = dma.done [#allocation10], 256
    $region41: #{tpu_custom_call.1} parent=1 // pred_fallthru
      _
    %1001 = vsyncpa [#allocation3], 1
    %1002 = vsyncpa [#allocation6], 1
    %1003 = vsyncpa [#allocation4], 1
    %1004 = vsyncpa [#allocation10], 1

// kernel: tpu_custom_call.1
$region0: #{tpu_custom_call.1}
  #allocation0 [shape = 'u32[]', space=smem, size = 0x4, offset = 0x4, fixed_abs, tag = 'smem constant byte address 0x4 - core index']
  #allocation1 [shape = 'u32[144,128]{1,0:T(1,128)}', space=vmem, size = 0x12000, scoped, tag = 'internal scratch']
  %s0 = inlined_call_operand.hbm [shape: bf16[16,128], index: 0, kind: input, shape index: {}]
  %s1 = inlined_call_operand.hbm [shape: bf16[8,128,128], index: 1, kind: input, shape index: {}]
  %s2 = inlined_call_operand.hbm [shape: f32[8,128], index: 2, kind: input, shape index: {}]
  %s3 = inlined_call_operand.hbm [shape: f32[16,128], index: 3, kind: output, shape index: {0}]
  %s4 = inlined_call_operand.hbm [shape: f32[16,128], index: 4, kind: output, shape index: {1}]
  %5 = xla_tuple %s3, %s4
  %s6 = sld [smem:[#allocation0]]
  $region42: #{tpu_custom_call.1} parent=0
    _
  %s8 = ssub.s32 1, %s6
  %s9 = scalar_select 0, %s8, %s6
  $region1: #{tpu_custom_call.1} parent=0
    #allocation2 [shape = 'u8[4096]{0}', space=vmem, size = 0x1000, scoped, tag = 'input window, operand 0, single buffered']
    #allocation3 [shape = 's32[1]{0}', space=sflag, size = 0x4, scoped, tag = 'scoped memory for tpu_custom_call.1']
    #allocation4 [shape = 's32[1]{0}', space=sflag, size = 0x4, scoped, tag = 'scoped memory for tpu_custom_call.1']
    #allocation5 [shape = 'u8[262144]{0}', space=vmem, size = 0x40000, scoped, tag = 'input window, operand 1, single buffered']
    #allocation6 [shape = 's32[1]{0}', space=sflag, size = 0x4, scoped, tag = 'scoped memory for tpu_custom_call.1']
    #allocation7 [shape = 'u8[4096]{0}', space=vmem, size = 0x1000, scoped, tag = 'input window, operand 2, single buffered']
    #allocation8 [shape = 'u8[8192]{0}', space=vmem, size = 0x2000, scoped, tag = 'output window, operand 0, single buffered']
    #allocation9 [shape = 'u8[8192]{0}', space=vmem, size = 0x2000, scoped, tag = 'output window, operand 1, single buffered']
    #allocation10 [shape = 's32[1]{0}', space=sflag, size = 0x4, scoped, tag = 'scoped memory for tpu_custom_call.1']
    %10 = vsyncpa [#allocation3], 0
    %11 = vsyncpa [#allocation6], 0
    %12 = vsyncpa [#allocation4], 0
    %13 = vsyncpa [#allocation10], 0
    // Predicated region
    $region2: #{tpu_custom_call.1} parent=1 // pred_check
      _
    $region3: #{tpu_custom_call.1} parent=1 // pred_check_branch
      %15 = sbr.rel (0) target = $region5
    $region4: #{tpu_custom_call.1} parent=1 // pred_region
      %s17 = ssub.s32 128, 128
      %18 = vsyncadd [#allocation3], %s17
      %s19 = sshll.u32 [#allocation2], 4
      %s20 = int_to_ptr.vmem [resolvable:$true] %s19
      %25 = dma.hbm_to_vmem [thread:$0]  %s0, 128, %s20, [#allocation3], 64, 64, 4
    $region5: #{tpu_custom_call.1} parent=1 // pred_fallthru
      _
    // Predicated region
    $region6: #{tpu_custom_call.1} parent=1 // pred_check
      _
    $region7: #{tpu_custom_call.1} parent=1 // pred_check_branch
      %27 = sbr.rel (0) target = $region9
    $region8: #{tpu_custom_call.1} parent=1 // pred_region
      %s29 = ssub.s32 8192, 8192
      %30 = vsyncadd [#allocation6], %s29
      %s31 = sshll.u32 [#allocation5], 4
      %s32 = int_to_ptr.vmem [resolvable:$true] %s31
      %37 = dma.hbm_to_vmem [thread:$0]  %s1, 8192, %s32, [#allocation6], 64, 64, 4
    $region9: #{tpu_custom_call.1} parent=1 // pred_fallthru
      _
    // Predicated region
    $region10: #{tpu_custom_call.1} parent=1 // pred_check
      _
    $region11: #{tpu_custom_call.1} parent=1 // pred_check_branch
      %39 = sbr.rel (0) target = $region13
    $region12: #{tpu_custom_call.1} parent=1 // pred_region
      %s41 = ssub.s32 128, 128
      %42 = vsyncadd [#allocation6], %s41
      %s44 = sshll.u32 [#allocation7], 4
      %s45 = int_to_ptr.vmem [resolvable:$true] %s44
      %47 = dma.hbm_to_vmem [thread:$0]  %s2, 128, %s45, [#allocation6]
    $region13: #{tpu_custom_call.1} parent=1 // pred_fallthru
      _
    // Predicated region
    $region14: #{tpu_custom_call.1} parent=1 // pred_check
      _
    $region15: #{tpu_custom_call.1} parent=1 // pred_check_branch
      %49 = sbr.rel (0) target = $region17
    $region16: #{tpu_custom_call.1} parent=1 // pred_region
      %50 = dma.done [#allocation3], 128
    $region17: #{tpu_custom_call.1} parent=1 // pred_fallthru
      _
    // Predicated region
    $region18: #{tpu_custom_call.1} parent=1 // pred_check
      _
    $region19: #{tpu_custom_call.1} parent=1 // pred_check_branch
      %52 = sbr.rel (0) target = $region21
    $region20: #{tpu_custom_call.1} parent=1 // pred_region
      %53 = dma.done [#allocation6], 8192
    $region21: #{tpu_custom_call.1} parent=1 // pred_fallthru
      _
    // Predicated region
    $region22: #{tpu_custom_call.1} parent=1 // pred_check
      _
    $region23: #{tpu_custom_call.1} parent=1 // pred_check_branch
      %55 = sbr.rel (0) target = $region25
    $region24: #{tpu_custom_call.1} parent=1 // pred_region
      %56 = dma.done [#allocation6], 128
    $region25: #{tpu_custom_call.1} parent=1 // pred_fallthru
      _
    %v58 = vld [vmem:[#allocation2] sm:$0xf]
    %v59 = vld [vmem:[#allocation2 + $0x4] sm:$0xf]
    %v60 = vld [vmem:[#allocation7] sm:$0xff]
    %v61 = vld [vmem:[#allocation5] sm:$0xf]
    %v62 = vld [vmem:[#allocation5 + $0x4] sm:$0xf]
    %v63 = vld [vmem:[#allocation5 + $0x8] sm:$0xf]
    %v64 = vld [vmem:[#allocation5 + $0xc] sm:$0xf]
    %v65 = vld [vmem:[#allocation5 + $0x10] sm:$0xf]
    %v66 = vld [vmem:[#allocation5 + $0x14] sm:$0xf]
    %v67 = vld [vmem:[#allocation5 + $0x18] sm:$0xf]
    %v68 = vld [vmem:[#allocation5 + $0x1c] sm:$0xf]
    %v69 = vld [vmem:[#allocation5 + $0x20] sm:$0xf]
    %v70 = vld [vmem:[#allocation5 + $0x24] sm:$0xf]
    %v71 = vld [vmem:[#allocation5 + $0x28] sm:$0xf]
    %v72 = vld [vmem:[#allocation5 + $0x2c] sm:$0xf]
    %v73 = vld [vmem:[#allocation5 + $0x30] sm:$0xf]
    %v74 = vld [vmem:[#allocation5 + $0x34] sm:$0xf]
    %v75 = vld [vmem:[#allocation5 + $0x38] sm:$0xf]
    %v76 = vld [vmem:[#allocation5 + $0x3c] sm:$0xf]
    %v77 = vlaneseq
    %v78 = vshrl.u32 %v77, 7
    %v79 = vsub.s32 0, %v78
    %v80 = vrot.slane %v60, %v79
    %v83 = vunpack.c.l.b16 %v58
    %v84 = vunpack.c.l.b16 %v59
    %v85 = vpack.c.b16 %v84, %v83
    %v103 = vunpack.c.l.b16 %v61
    %v104 = vunpack.c.l.b16 %v62
    %v105 = vunpack.c.l.b16 %v63
    %v106 = vunpack.c.l.b16 %v64
    %v107 = vunpack.c.l.b16 %v65
    %v108 = vunpack.c.l.b16 %v66
    %v109 = vunpack.c.l.b16 %v67
    %v110 = vunpack.c.l.b16 %v68
    %v111 = vunpack.c.l.b16 %v69
    %v112 = vunpack.c.l.b16 %v70
    %v113 = vunpack.c.l.b16 %v71
    %v114 = vunpack.c.l.b16 %v72
    %v115 = vunpack.c.l.b16 %v73
    %v116 = vunpack.c.l.b16 %v74
    %v117 = vunpack.c.l.b16 %v75
    %v118 = vunpack.c.l.b16 %v76
    %v119 = vpack.c.b16 %v104, %v103
    %v120 = vpack.c.b16 %v106, %v105
    %v121 = vpack.c.b16 %v108, %v107
    %v122 = vpack.c.b16 %v110, %v109
    %v123 = vpack.c.b16 %v112, %v111
    %v124 = vpack.c.b16 %v114, %v113
    %v125 = vpack.c.b16 %v116, %v115
    %v126 = vpack.c.b16 %v118, %v117
    %135 = vmatprep.subr.bf16.mxu0 0
    %136 = vmatpush1.bf16.msra.mxu0 %v119
    %137 = vmatprep.subr.bf16.mxu0 0
    %138 = vmatpush1.bf16.msra.mxu0 %v120
    %139 = vmatprep.subr.bf16.mxu0 0
    %140 = vmatpush1.bf16.msra.mxu0 %v121
    %141 = vmatprep.subr.bf16.mxu0 0
    %142 = vmatpush1.bf16.msra.mxu0 %v122
    %143 = vmatprep.subr.bf16.mxu0 0
    %144 = vmatpush1.bf16.msra.mxu0 %v123
    %145 = vmatprep.subr.bf16.mxu0 0
    %146 = vmatpush1.bf16.msra.mxu0 %v124
    %147 = vmatprep.subr.bf16.mxu0 0
    %148 = vmatpush1.bf16.msra.mxu0 %v125
    %149 = vmatprep.subr.bf16.mxu0 0
    %150 = vmatpush1.bf16.msra.mxu0 %v126
    %151 = vmatprep.subr.bf16.mxu0 0
    %152 = vmatpush1.bf16.msra.mxu0 0
    %153 = vmatprep.subr.bf16.mxu0 0
    %154 = vmatpush1.bf16.msra.mxu0 0
    %155 = vmatprep.subr.bf16.mxu0 0
    %156 = vmatpush1.bf16.msra.mxu0 0
    %157 = vmatprep.subr.bf16.mxu0 0
    %158 = vmatpush1.bf16.msra.mxu0 0
    %159 = vmatprep.subr.bf16.mxu0 0
    %160 = vmatpush1.bf16.msra.mxu0 0
    %161 = vmatprep.subr.bf16.mxu0 0
    %162 = vmatpush1.bf16.msra.mxu0 0
    %163 = vmatprep.subr.bf16.mxu0 0
    %164 = vmatpush1.bf16.msra.mxu0 0
    %165 = vmatprep.subr.bf16.mxu0 0
    %166 = vmatpush1.bf16.msra.mxu0 0
    %167 = vmatprep.mubr.bf16.mxu0 0
    %168 = vmatmul.mubr.bf16.gmra.mrb[0].mxu0 %v85
    %v169 = vpop.f32.mrb[0].mxu0
    %v170 = vadd.f32 %v80, %v169
    %v171 = vpop.f32.mrb[0].mxu0
    %v172 = vpop.f32.mrb[0].mxu0
    %v173 = vadd.f32 %v80, %v172
    %v174 = vpop.f32.mrb[0].mxu0
    %175 = vdwg.mxu0
    %v176 = vmax.f32 %v170, 0.0
    %v177 = vmax.f32 %v173, 0.0
    %v178 = vpack.c.bf16 %v177, %v176
    %s179 = scalar_lea.vmem [#allocation5], 64
    %v180 = vld [vmem:[%s179] sm:$0xf]
    %v181 = vld [vmem:[%s179 + $0x4] sm:$0xf]
    %v182 = vld [vmem:[%s179 + $0x8] sm:$0xf]
    %v183 = vld [vmem:[%s179 + $0xc] sm:$0xf]
    %v184 = vld [vmem:[%s179 + $0x10] sm:$0xf]
    %v185 = vld [vmem:[%s179 + $0x14] sm:$0xf]
    %v186 = vld [vmem:[%s179 + $0x18] sm:$0xf]
    %v187 = vld [vmem:[%s179 + $0x1c] sm:$0xf]
    %v188 = vld [vmem:[%s179 + $0x20] sm:$0xf]
    %v189 = vld [vmem:[%s179 + $0x24] sm:$0xf]
    %v190 = vld [vmem:[%s179 + $0x28] sm:$0xf]
    %v191 = vld [vmem:[%s179 + $0x2c] sm:$0xf]
    %v192 = vld [vmem:[%s179 + $0x30] sm:$0xf]
    %v193 = vld [vmem:[%s179 + $0x34] sm:$0xf]
    %v194 = vld [vmem:[%s179 + $0x38] sm:$0xf]
    %v195 = vld [vmem:[%s179 + $0x3c] sm:$0xf]
    %v196 = vlaneseq
    %v197 = vshrl.u32 %v196, 7
    %v198 = vsub.s32 1, %v197
    %v199 = vrot.slane %v60, %v198
    %v216 = vunpack.c.l.b16 %v180
    %v217 = vunpack.c.l.b16 %v181
    %v218 = vunpack.c.l.b16 %v182
    %v219 = vunpack.c.l.b16 %v183
    %v220 = vunpack.c.l.b16 %v184
    %v221 = vunpack.c.l.b16 %v185
    %v222 = vunpack.c.l.b16 %v186
    %v223 = vunpack.c.l.b16 %v187
    %v224 = vunpack.c.l.b16 %v188
    %v225 = vunpack.c.l.b16 %v189
    %v226 = vunpack.c.l.b16 %v190
    %v227 = vunpack.c.l.b16 %v191
    %v228 = vunpack.c.l.b16 %v192
    %v229 = vunpack.c.l.b16 %v193
    %v230 = vunpack.c.l.b16 %v194
    %v231 = vunpack.c.l.b16 %v195
    %v232 = vpack.c.b16 %v217, %v216
    %v233 = vpack.c.b16 %v219, %v218
    %v234 = vpack.c.b16 %v221, %v220
    %v235 = vpack.c.b16 %v223, %v222
    %v236 = vpack.c.b16 %v225, %v224
    %v237 = vpack.c.b16 %v227, %v226
    %v238 = vpack.c.b16 %v229, %v228
    %v239 = vpack.c.b16 %v231, %v230
    %248 = vmatprep.subr.bf16.mxu0 0
    %249 = vmatpush1.bf16.msra.mxu0 %v232
    %250 = vmatprep.subr.bf16.mxu0 0
    %251 = vmatpush1.bf16.msra.mxu0 %v233
    %252 = vmatprep.subr.bf16.mxu0 0
    %253 = vmatpush1.bf16.msra.mxu0 %v234
    %254 = vmatprep.subr.bf16.mxu0 0
    %255 = vmatpush1.bf16.msra.mxu0 %v235
    %256 = vmatprep.subr.bf16.mxu0 0
    %257 = vmatpush1.bf16.msra.mxu0 %v236
    %258 = vmatprep.subr.bf16.mxu0 0
    %259 = vmatpush1.bf16.msra.mxu0 %v237
    %260 = vmatprep.subr.bf16.mxu0 0
    %261 = vmatpush1.bf16.msra.mxu0 %v238
    %262 = vmatprep.subr.bf16.mxu0 0
    %263 = vmatpush1.bf16.msra.mxu0 %v239
    %264 = vmatprep.subr.bf16.mxu0 0
    %265 = vmatpush1.bf16.msra.mxu0 0
    %266 = vmatprep.subr.bf16.mxu0 0
    %267 = vmatpush1.bf16.msra.mxu0 0
    %268 = vmatprep.subr.bf16.mxu0 0
    %269 = vmatpush1.bf16.msra.mxu0 0
    %270 = vmatprep.subr.bf16.mxu0 0
    %271 = vmatpush1.bf16.msra.mxu0 0
    %272 = vmatprep.subr.bf16.mxu0 0
    %273 = vmatpush1.bf16.msra.mxu0 0
    %274 = vmatprep.subr.bf16.mxu0 0
    %275 = vmatpush1.bf16.msra.mxu0 0
    %276 = vmatprep.subr.bf16.mxu0 0
    %277 = vmatpush1.bf16.msra.mxu0 0
    %278 = vmatprep.subr.bf16.mxu0 0
    %279 = vmatpush1.bf16.msra.mxu0 0
    %280 = vmatprep.mubr.bf16.mxu0 0
    %281 = vmatmul.mubr.bf16.gmra.mrb[0].mxu0 %v178
    %v282 = vpop.f32.mrb[0].mxu0
    %v283 = vadd.f32 %v199, %v282
    %v284 = vpop.f32.mrb[0].mxu0
    %v285 = vpop.f32.mrb[0].mxu0
    %v286 = vadd.f32 %v199, %v285
    %v287 = vpop.f32.mrb[0].mxu0
    %288 = vdwg.mxu0
    %v289 = vmax.f32 %v283, 0.0
    %v290 = vmax.f32 %v286, 0.0
    %v291 = vpack.c.bf16 %v290, %v289
    %s292 = scalar_lea.vmem [#allocation5], 128
    %v293 = vld [vmem:[%s292] sm:$0xf]
    %v294 = vld [vmem:[%s292 + $0x4] sm:$0xf]
    %v295 = vld [vmem:[%s292 + $0x8] sm:$0xf]
    %v296 = vld [vmem:[%s292 + $0xc] sm:$0xf]
    %v297 = vld [vmem:[%s292 + $0x10] sm:$0xf]
    %v298 = vld [vmem:[%s292 + $0x14] sm:$0xf]
    %v299 = vld [vmem:[%s292 + $0x18] sm:$0xf]
    %v300 = vld [vmem:[%s292 + $0x1c] sm:$0xf]
    %v301 = vld [vmem:[%s292 + $0x20] sm:$0xf]
    %v302 = vld [vmem:[%s292 + $0x24] sm:$0xf]
    %v303 = vld [vmem:[%s292 + $0x28] sm:$0xf]
    %v304 = vld [vmem:[%s292 + $0x2c] sm:$0xf]
    %v305 = vld [vmem:[%s292 + $0x30] sm:$0xf]
    %v306 = vld [vmem:[%s292 + $0x34] sm:$0xf]
    %v307 = vld [vmem:[%s292 + $0x38] sm:$0xf]
    %v308 = vld [vmem:[%s292 + $0x3c] sm:$0xf]
    %v309 = vlaneseq
    %v310 = vshrl.u32 %v309, 7
    %v311 = vsub.s32 2, %v310
    %v312 = vrot.slane %v60, %v311
    %v329 = vunpack.c.l.b16 %v293
    %v330 = vunpack.c.l.b16 %v294
    %v331 = vunpack.c.l.b16 %v295
    %v332 = vunpack.c.l.b16 %v296
    %v333 = vunpack.c.l.b16 %v297
    %v334 = vunpack.c.l.b16 %v298
    %v335 = vunpack.c.l.b16 %v299
    %v336 = vunpack.c.l.b16 %v300
    %v337 = vunpack.c.l.b16 %v301
    %v338 = vunpack.c.l.b16 %v302
    %v339 = vunpack.c.l.b16 %v303
    %v340 = vunpack.c.l.b16 %v304
    %v341 = vunpack.c.l.b16 %v305
    %v342 = vunpack.c.l.b16 %v306
    %v343 = vunpack.c.l.b16 %v307
    %v344 = vunpack.c.l.b16 %v308
    %v345 = vpack.c.b16 %v330, %v329
    %v346 = vpack.c.b16 %v332, %v331
    %v347 = vpack.c.b16 %v334, %v333
    %v348 = vpack.c.b16 %v336, %v335
    %v349 = vpack.c.b16 %v338, %v337
    %v350 = vpack.c.b16 %v340, %v339
    %v351 = vpack.c.b16 %v342, %v341
    %v352 = vpack.c.b16 %v344, %v343
    %361 = vmatprep.subr.bf16.mxu0 0
    %362 = vmatpush1.bf16.msra.mxu0 %v345
    %363 = vmatprep.subr.bf16.mxu0 0
    %364 = vmatpush1.bf16.msra.mxu0 %v346
    %365 = vmatprep.subr.bf16.mxu0 0
    %366 = vmatpush1.bf16.msra.mxu0 %v347
    %367 = vmatprep.subr.bf16.mxu0 0
    %368 = vmatpush1.bf16.msra.mxu0 %v348
    %369 = vmatprep.subr.bf16.mxu0 0
    %370 = vmatpush1.bf16.msra.mxu0 %v349
    %371 = vmatprep.subr.bf16.mxu0 0
    %372 = vmatpush1.bf16.msra.mxu0 %v350
    %373 = vmatprep.subr.bf16.mxu0 0
    %374 = vmatpush1.bf16.msra.mxu0 %v351
    %375 = vmatprep.subr.bf16.mxu0 0
    %376 = vmatpush1.bf16.msra.mxu0 %v352
    %377 = vmatprep.subr.bf16.mxu0 0
    %378 = vmatpush1.bf16.msra.mxu0 0
    %379 = vmatprep.subr.bf16.mxu0 0
    %380 = vmatpush1.bf16.msra.mxu0 0
    %381 = vmatprep.subr.bf16.mxu0 0
    %382 = vmatpush1.bf16.msra.mxu0 0
    %383 = vmatprep.subr.bf16.mxu0 0
    %384 = vmatpush1.bf16.msra.mxu0 0
    %385 = vmatprep.subr.bf16.mxu0 0
    %386 = vmatpush1.bf16.msra.mxu0 0
    %387 = vmatprep.subr.bf16.mxu0 0
    %388 = vmatpush1.bf16.msra.mxu0 0
    %389 = vmatprep.subr.bf16.mxu0 0
    %390 = vmatpush1.bf16.msra.mxu0 0
    %391 = vmatprep.subr.bf16.mxu0 0
    %392 = vmatpush1.bf16.msra.mxu0 0
    %393 = vmatprep.mubr.bf16.mxu0 0
    %394 = vmatmul.mubr.bf16.gmra.mrb[0].mxu0 %v291
    %v395 = vpop.f32.mrb[0].mxu0
    %v396 = vadd.f32 %v312, %v395
    %v397 = vpop.f32.mrb[0].mxu0
    %v398 = vpop.f32.mrb[0].mxu0
    %v399 = vadd.f32 %v312, %v398
    %v400 = vpop.f32.mrb[0].mxu0
    %401 = vdwg.mxu0
    %v402 = vmax.f32 %v396, 0.0
    %v403 = vmax.f32 %v399, 0.0
    %v404 = vpack.c.bf16 %v403, %v402
    %s405 = scalar_lea.vmem [#allocation5], 192
    %v406 = vld [vmem:[%s405] sm:$0xf]
    %v407 = vld [vmem:[%s405 + $0x4] sm:$0xf]
    %v408 = vld [vmem:[%s405 + $0x8] sm:$0xf]
    %v409 = vld [vmem:[%s405 + $0xc] sm:$0xf]
    %v410 = vld [vmem:[%s405 + $0x10] sm:$0xf]
    %v411 = vld [vmem:[%s405 + $0x14] sm:$0xf]
    %v412 = vld [vmem:[%s405 + $0x18] sm:$0xf]
    %v413 = vld [vmem:[%s405 + $0x1c] sm:$0xf]
    %v414 = vld [vmem:[%s405 + $0x20] sm:$0xf]
    %v415 = vld [vmem:[%s405 + $0x24] sm:$0xf]
    %v416 = vld [vmem:[%s405 + $0x28] sm:$0xf]
    %v417 = vld [vmem:[%s405 + $0x2c] sm:$0xf]
    %v418 = vld [vmem:[%s405 + $0x30] sm:$0xf]
    %v419 = vld [vmem:[%s405 + $0x34] sm:$0xf]
    %v420 = vld [vmem:[%s405 + $0x38] sm:$0xf]
    %v421 = vld [vmem:[%s405 + $0x3c] sm:$0xf]
    %v422 = vlaneseq
    %v423 = vshrl.u32 %v422, 7
    %v424 = vsub.s32 3, %v423
    %v425 = vrot.slane %v60, %v424
    %v442 = vunpack.c.l.b16 %v406
    %v443 = vunpack.c.l.b16 %v407
    %v444 = vunpack.c.l.b16 %v408
    %v445 = vunpack.c.l.b16 %v409
    %v446 = vunpack.c.l.b16 %v410
    %v447 = vunpack.c.l.b16 %v411
    %v448 = vunpack.c.l.b16 %v412
    %v449 = vunpack.c.l.b16 %v413
    %v450 = vunpack.c.l.b16 %v414
    %v451 = vunpack.c.l.b16 %v415
    %v452 = vunpack.c.l.b16 %v416
    %v453 = vunpack.c.l.b16 %v417
    %v454 = vunpack.c.l.b16 %v418
    %v455 = vunpack.c.l.b16 %v419
    %v456 = vunpack.c.l.b16 %v420
    %v457 = vunpack.c.l.b16 %v421
    %v458 = vpack.c.b16 %v443, %v442
    %v459 = vpack.c.b16 %v445, %v444
    %v460 = vpack.c.b16 %v447, %v446
    %v461 = vpack.c.b16 %v449, %v448
    %v462 = vpack.c.b16 %v451, %v450
    %v463 = vpack.c.b16 %v453, %v452
    %v464 = vpack.c.b16 %v455, %v454
    %v465 = vpack.c.b16 %v457, %v456
    %474 = vmatprep.subr.bf16.mxu0 0
    %475 = vmatpush1.bf16.msra.mxu0 %v458
    %476 = vmatprep.subr.bf16.mxu0 0
    %477 = vmatpush1.bf16.msra.mxu0 %v459
    %478 = vmatprep.subr.bf16.mxu0 0
    %479 = vmatpush1.bf16.msra.mxu0 %v460
    %480 = vmatprep.subr.bf16.mxu0 0
    %481 = vmatpush1.bf16.msra.mxu0 %v461
    %482 = vmatprep.subr.bf16.mxu0 0
    %483 = vmatpush1.bf16.msra.mxu0 %v462
    %484 = vmatprep.subr.bf16.mxu0 0
    %485 = vmatpush1.bf16.msra.mxu0 %v463
    %486 = vmatprep.subr.bf16.mxu0 0
    %487 = vmatpush1.bf16.msra.mxu0 %v464
    %488 = vmatprep.subr.bf16.mxu0 0
    %489 = vmatpush1.bf16.msra.mxu0 %v465
    %490 = vmatprep.subr.bf16.mxu0 0
    %491 = vmatpush1.bf16.msra.mxu0 0
    %492 = vmatprep.subr.bf16.mxu0 0
    %493 = vmatpush1.bf16.msra.mxu0 0
    %494 = vmatprep.subr.bf16.mxu0 0
    %495 = vmatpush1.bf16.msra.mxu0 0
    %496 = vmatprep.subr.bf16.mxu0 0
    %497 = vmatpush1.bf16.msra.mxu0 0
    %498 = vmatprep.subr.bf16.mxu0 0
    %499 = vmatpush1.bf16.msra.mxu0 0
    %500 = vmatprep.subr.bf16.mxu0 0
    %501 = vmatpush1.bf16.msra.mxu0 0
    %502 = vmatprep.subr.bf16.mxu0 0
    %503 = vmatpush1.bf16.msra.mxu0 0
    %504 = vmatprep.subr.bf16.mxu0 0
    %505 = vmatpush1.bf16.msra.mxu0 0
    %506 = vmatprep.mubr.bf16.mxu0 0
    %507 = vmatmul.mubr.bf16.gmra.mrb[0].mxu0 %v404
    %v508 = vpop.f32.mrb[0].mxu0
    %v509 = vadd.f32 %v425, %v508
    %v510 = vpop.f32.mrb[0].mxu0
    %v511 = vpop.f32.mrb[0].mxu0
    %v512 = vadd.f32 %v425, %v511
    %v513 = vpop.f32.mrb[0].mxu0
    %514 = vdwg.mxu0
    %v515 = vtanh.pop %v509
    %v516 = vtanh.pop %v512
    %517 = vst [vmem:[#allocation8] sm:$0xff] %v515
    %518 = vst [vmem:[#allocation8 + $0x8] sm:$0xff] %v516
    %v519 = vpack.c.bf16 %v516, %v515
    %s520 = scalar_lea.vmem [#allocation5], 256
    %v521 = vld [vmem:[%s520] sm:$0xf]
    %v522 = vld [vmem:[%s520 + $0x4] sm:$0xf]
    %v523 = vld [vmem:[%s520 + $0x8] sm:$0xf]
    %v524 = vld [vmem:[%s520 + $0xc] sm:$0xf]
    %v525 = vld [vmem:[%s520 + $0x10] sm:$0xf]
    %v526 = vld [vmem:[%s520 + $0x14] sm:$0xf]
    %v527 = vld [vmem:[%s520 + $0x18] sm:$0xf]
    %v528 = vld [vmem:[%s520 + $0x1c] sm:$0xf]
    %v529 = vld [vmem:[%s520 + $0x20] sm:$0xf]
    %v530 = vld [vmem:[%s520 + $0x24] sm:$0xf]
    %v531 = vld [vmem:[%s520 + $0x28] sm:$0xf]
    %v532 = vld [vmem:[%s520 + $0x2c] sm:$0xf]
    %v533 = vld [vmem:[%s520 + $0x30] sm:$0xf]
    %v534 = vld [vmem:[%s520 + $0x34] sm:$0xf]
    %v535 = vld [vmem:[%s520 + $0x38] sm:$0xf]
    %v536 = vld [vmem:[%s520 + $0x3c] sm:$0xf]
    %v537 = vlaneseq
    %v538 = vshrl.u32 %v537, 7
    %v539 = vsub.s32 4, %v538
    %v540 = vrot.slane %v60, %v539
    %v557 = vunpack.c.l.b16 %v521
    %v558 = vunpack.c.l.b16 %v522
    %v559 = vunpack.c.l.b16 %v523
    %v560 = vunpack.c.l.b16 %v524
    %v561 = vunpack.c.l.b16 %v525
    %v562 = vunpack.c.l.b16 %v526
    %v563 = vunpack.c.l.b16 %v527
    %v564 = vunpack.c.l.b16 %v528
    %v565 = vunpack.c.l.b16 %v529
    %v566 = vunpack.c.l.b16 %v530
    %v567 = vunpack.c.l.b16 %v531
    %v568 = vunpack.c.l.b16 %v532
    %v569 = vunpack.c.l.b16 %v533
    %v570 = vunpack.c.l.b16 %v534
    %v571 = vunpack.c.l.b16 %v535
    %v572 = vunpack.c.l.b16 %v536
    %v573 = vpack.c.b16 %v558, %v557
    %v574 = vpack.c.b16 %v560, %v559
    %v575 = vpack.c.b16 %v562, %v561
    %v576 = vpack.c.b16 %v564, %v563
    %v577 = vpack.c.b16 %v566, %v565
    %v578 = vpack.c.b16 %v568, %v567
    %v579 = vpack.c.b16 %v570, %v569
    %v580 = vpack.c.b16 %v572, %v571
    %589 = vmatprep.subr.bf16.mxu0 0
    %590 = vmatpush1.bf16.msra.mxu0 %v573
    %591 = vmatprep.subr.bf16.mxu0 0
    %592 = vmatpush1.bf16.msra.mxu0 %v574
    %593 = vmatprep.subr.bf16.mxu0 0
    %594 = vmatpush1.bf16.msra.mxu0 %v575
    %595 = vmatprep.subr.bf16.mxu0 0
    %596 = vmatpush1.bf16.msra.mxu0 %v576
    %597 = vmatprep.subr.bf16.mxu0 0
    %598 = vmatpush1.bf16.msra.mxu0 %v577
    %599 = vmatprep.subr.bf16.mxu0 0
    %600 = vmatpush1.bf16.msra.mxu0 %v578
    %601 = vmatprep.subr.bf16.mxu0 0
    %602 = vmatpush1.bf16.msra.mxu0 %v579
    %603 = vmatprep.subr.bf16.mxu0 0
    %604 = vmatpush1.bf16.msra.mxu0 %v580
    %605 = vmatprep.subr.bf16.mxu0 0
    %606 = vmatpush1.bf16.msra.mxu0 0
    %607 = vmatprep.subr.bf16.mxu0 0
    %608 = vmatpush1.bf16.msra.mxu0 0
    %609 = vmatprep.subr.bf16.mxu0 0
    %610 = vmatpush1.bf16.msra.mxu0 0
    %611 = vmatprep.subr.bf16.mxu0 0
    %612 = vmatpush1.bf16.msra.mxu0 0
    %613 = vmatprep.subr.bf16.mxu0 0
    %614 = vmatpush1.bf16.msra.mxu0 0
    %615 = vmatprep.subr.bf16.mxu0 0
    %616 = vmatpush1.bf16.msra.mxu0 0
    %617 = vmatprep.subr.bf16.mxu0 0
    %618 = vmatpush1.bf16.msra.mxu0 0
    %619 = vmatprep.subr.bf16.mxu0 0
    %620 = vmatpush1.bf16.msra.mxu0 0
    %621 = vmatprep.mubr.bf16.mxu0 0
    %622 = vmatmul.mubr.bf16.gmra.mrb[0].mxu0 %v519
    %v623 = vpop.f32.mrb[0].mxu0
    %v624 = vadd.f32 %v540, %v623
    %v625 = vpop.f32.mrb[0].mxu0
    %v626 = vpop.f32.mrb[0].mxu0
    %v627 = vadd.f32 %v540, %v626
    %v628 = vpop.f32.mrb[0].mxu0
    %629 = vdwg.mxu0
    %v630 = vmax.f32 %v624, 0.0
    %v631 = vmax.f32 %v627, 0.0
    %v632 = vpack.c.bf16 %v631, %v630
    %s633 = scalar_lea.vmem [#allocation5], 320
    %v634 = vld [vmem:[%s633] sm:$0xf]
    %v635 = vld [vmem:[%s633 + $0x4] sm:$0xf]
    %v636 = vld [vmem:[%s633 + $0x8] sm:$0xf]
    %v637 = vld [vmem:[%s633 + $0xc] sm:$0xf]
    %v638 = vld [vmem:[%s633 + $0x10] sm:$0xf]
    %v639 = vld [vmem:[%s633 + $0x14] sm:$0xf]
    %v640 = vld [vmem:[%s633 + $0x18] sm:$0xf]
    %v641 = vld [vmem:[%s633 + $0x1c] sm:$0xf]
    %v642 = vld [vmem:[%s633 + $0x20] sm:$0xf]
    %v643 = vld [vmem:[%s633 + $0x24] sm:$0xf]
    %v644 = vld [vmem:[%s633 + $0x28] sm:$0xf]
    %v645 = vld [vmem:[%s633 + $0x2c] sm:$0xf]
    %v646 = vld [vmem:[%s633 + $0x30] sm:$0xf]
    %v647 = vld [vmem:[%s633 + $0x34] sm:$0xf]
    %v648 = vld [vmem:[%s633 + $0x38] sm:$0xf]
    %v649 = vld [vmem:[%s633 + $0x3c] sm:$0xf]
    %v650 = vlaneseq
    %v651 = vshrl.u32 %v650, 7
    %v652 = vsub.s32 5, %v651
    %v653 = vrot.slane %v60, %v652
    %v670 = vunpack.c.l.b16 %v634
    %v671 = vunpack.c.l.b16 %v635
    %v672 = vunpack.c.l.b16 %v636
    %v673 = vunpack.c.l.b16 %v637
    %v674 = vunpack.c.l.b16 %v638
    %v675 = vunpack.c.l.b16 %v639
    %v676 = vunpack.c.l.b16 %v640
    %v677 = vunpack.c.l.b16 %v641
    %v678 = vunpack.c.l.b16 %v642
    %v679 = vunpack.c.l.b16 %v643
    %v680 = vunpack.c.l.b16 %v644
    %v681 = vunpack.c.l.b16 %v645
    %v682 = vunpack.c.l.b16 %v646
    %v683 = vunpack.c.l.b16 %v647
    %v684 = vunpack.c.l.b16 %v648
    %v685 = vunpack.c.l.b16 %v649
    %v686 = vpack.c.b16 %v671, %v670
    %v687 = vpack.c.b16 %v673, %v672
    %v688 = vpack.c.b16 %v675, %v674
    %v689 = vpack.c.b16 %v677, %v676
    %v690 = vpack.c.b16 %v679, %v678
    %v691 = vpack.c.b16 %v681, %v680
    %v692 = vpack.c.b16 %v683, %v682
    %v693 = vpack.c.b16 %v685, %v684
    %702 = vmatprep.subr.bf16.mxu0 0
    %703 = vmatpush1.bf16.msra.mxu0 %v686
    %704 = vmatprep.subr.bf16.mxu0 0
    %705 = vmatpush1.bf16.msra.mxu0 %v687
    %706 = vmatprep.subr.bf16.mxu0 0
    %707 = vmatpush1.bf16.msra.mxu0 %v688
    %708 = vmatprep.subr.bf16.mxu0 0
    %709 = vmatpush1.bf16.msra.mxu0 %v689
    %710 = vmatprep.subr.bf16.mxu0 0
    %711 = vmatpush1.bf16.msra.mxu0 %v690
    %712 = vmatprep.subr.bf16.mxu0 0
    %713 = vmatpush1.bf16.msra.mxu0 %v691
    %714 = vmatprep.subr.bf16.mxu0 0
    %715 = vmatpush1.bf16.msra.mxu0 %v692
    %716 = vmatprep.subr.bf16.mxu0 0
    %717 = vmatpush1.bf16.msra.mxu0 %v693
    %718 = vmatprep.subr.bf16.mxu0 0
    %719 = vmatpush1.bf16.msra.mxu0 0
    %720 = vmatprep.subr.bf16.mxu0 0
    %721 = vmatpush1.bf16.msra.mxu0 0
    %722 = vmatprep.subr.bf16.mxu0 0
    %723 = vmatpush1.bf16.msra.mxu0 0
    %724 = vmatprep.subr.bf16.mxu0 0
    %725 = vmatpush1.bf16.msra.mxu0 0
    %726 = vmatprep.subr.bf16.mxu0 0
    %727 = vmatpush1.bf16.msra.mxu0 0
    %728 = vmatprep.subr.bf16.mxu0 0
    %729 = vmatpush1.bf16.msra.mxu0 0
    %730 = vmatprep.subr.bf16.mxu0 0
    %731 = vmatpush1.bf16.msra.mxu0 0
    %732 = vmatprep.subr.bf16.mxu0 0
    %733 = vmatpush1.bf16.msra.mxu0 0
    %734 = vmatprep.mubr.bf16.mxu0 0
    %735 = vmatmul.mubr.bf16.gmra.mrb[0].mxu0 %v632
    %v736 = vpop.f32.mrb[0].mxu0
    %v737 = vadd.f32 %v653, %v736
    %v738 = vpop.f32.mrb[0].mxu0
    %v739 = vpop.f32.mrb[0].mxu0
    %v740 = vadd.f32 %v653, %v739
    %v741 = vpop.f32.mrb[0].mxu0
    %742 = vdwg.mxu0
    %v743 = vmax.f32 %v737, 0.0
    %v744 = vmax.f32 %v740, 0.0
    %v745 = vpack.c.bf16 %v744, %v743
    %s746 = scalar_lea.vmem [#allocation5], 384
    %v747 = vld [vmem:[%s746] sm:$0xf]
    %v748 = vld [vmem:[%s746 + $0x4] sm:$0xf]
    %v749 = vld [vmem:[%s746 + $0x8] sm:$0xf]
    %v750 = vld [vmem:[%s746 + $0xc] sm:$0xf]
    %v751 = vld [vmem:[%s746 + $0x10] sm:$0xf]
    %v752 = vld [vmem:[%s746 + $0x14] sm:$0xf]
    %v753 = vld [vmem:[%s746 + $0x18] sm:$0xf]
    %v754 = vld [vmem:[%s746 + $0x1c] sm:$0xf]
    %v755 = vld [vmem:[%s746 + $0x20] sm:$0xf]
    %v756 = vld [vmem:[%s746 + $0x24] sm:$0xf]
    %v757 = vld [vmem:[%s746 + $0x28] sm:$0xf]
    %v758 = vld [vmem:[%s746 + $0x2c] sm:$0xf]
    %v759 = vld [vmem:[%s746 + $0x30] sm:$0xf]
    %v760 = vld [vmem:[%s746 + $0x34] sm:$0xf]
    %v761 = vld [vmem:[%s746 + $0x38] sm:$0xf]
    %v762 = vld [vmem:[%s746 + $0x3c] sm:$0xf]
    %v763 = vlaneseq
    %v764 = vshrl.u32 %v763, 7
    %v765 = vsub.s32 6, %v764
    %v766 = vrot.slane %v60, %v765
    %v783 = vunpack.c.l.b16 %v747
    %v784 = vunpack.c.l.b16 %v748
    %v785 = vunpack.c.l.b16 %v749
    %v786 = vunpack.c.l.b16 %v750
    %v787 = vunpack.c.l.b16 %v751
    %v788 = vunpack.c.l.b16 %v752
    %v789 = vunpack.c.l.b16 %v753
    %v790 = vunpack.c.l.b16 %v754
    %v791 = vunpack.c.l.b16 %v755
    %v792 = vunpack.c.l.b16 %v756
    %v793 = vunpack.c.l.b16 %v757
    %v794 = vunpack.c.l.b16 %v758
    %v795 = vunpack.c.l.b16 %v759
    %v796 = vunpack.c.l.b16 %v760
    %v797 = vunpack.c.l.b16 %v761
    %v798 = vunpack.c.l.b16 %v762
    %v799 = vpack.c.b16 %v784, %v783
    %v800 = vpack.c.b16 %v786, %v785
    %v801 = vpack.c.b16 %v788, %v787
    %v802 = vpack.c.b16 %v790, %v789
    %v803 = vpack.c.b16 %v792, %v791
    %v804 = vpack.c.b16 %v794, %v793
    %v805 = vpack.c.b16 %v796, %v795
    %v806 = vpack.c.b16 %v798, %v797
    %815 = vmatprep.subr.bf16.mxu0 0
    %816 = vmatpush1.bf16.msra.mxu0 %v799
    %817 = vmatprep.subr.bf16.mxu0 0
    %818 = vmatpush1.bf16.msra.mxu0 %v800
    %819 = vmatprep.subr.bf16.mxu0 0
    %820 = vmatpush1.bf16.msra.mxu0 %v801
    %821 = vmatprep.subr.bf16.mxu0 0
    %822 = vmatpush1.bf16.msra.mxu0 %v802
    %823 = vmatprep.subr.bf16.mxu0 0
    %824 = vmatpush1.bf16.msra.mxu0 %v803
    %825 = vmatprep.subr.bf16.mxu0 0
    %826 = vmatpush1.bf16.msra.mxu0 %v804
    %827 = vmatprep.subr.bf16.mxu0 0
    %828 = vmatpush1.bf16.msra.mxu0 %v805
    %829 = vmatprep.subr.bf16.mxu0 0
    %830 = vmatpush1.bf16.msra.mxu0 %v806
    %831 = vmatprep.subr.bf16.mxu0 0
    %832 = vmatpush1.bf16.msra.mxu0 0
    %833 = vmatprep.subr.bf16.mxu0 0
    %834 = vmatpush1.bf16.msra.mxu0 0
    %835 = vmatprep.subr.bf16.mxu0 0
    %836 = vmatpush1.bf16.msra.mxu0 0
    %837 = vmatprep.subr.bf16.mxu0 0
    %838 = vmatpush1.bf16.msra.mxu0 0
    %839 = vmatprep.subr.bf16.mxu0 0
    %840 = vmatpush1.bf16.msra.mxu0 0
    %841 = vmatprep.subr.bf16.mxu0 0
    %842 = vmatpush1.bf16.msra.mxu0 0
    %843 = vmatprep.subr.bf16.mxu0 0
    %844 = vmatpush1.bf16.msra.mxu0 0
    %845 = vmatprep.subr.bf16.mxu0 0
    %846 = vmatpush1.bf16.msra.mxu0 0
    %847 = vmatprep.mubr.bf16.mxu0 0
    %848 = vmatmul.mubr.bf16.gmra.mrb[0].mxu0 %v745
    %v849 = vpop.f32.mrb[0].mxu0
    %v850 = vadd.f32 %v766, %v849
    %v851 = vpop.f32.mrb[0].mxu0
    %v852 = vpop.f32.mrb[0].mxu0
    %v853 = vadd.f32 %v766, %v852
    %v854 = vpop.f32.mrb[0].mxu0
    %855 = vdwg.mxu0
    %v856 = vmax.f32 %v850, 0.0
    %v857 = vmax.f32 %v853, 0.0
    %v858 = vpack.c.bf16 %v857, %v856
    %s859 = scalar_lea.vmem [#allocation5], 448
    %v860 = vld [vmem:[%s859] sm:$0xf]
    %v861 = vld [vmem:[%s859 + $0x4] sm:$0xf]
    %v862 = vld [vmem:[%s859 + $0x8] sm:$0xf]
    %v863 = vld [vmem:[%s859 + $0xc] sm:$0xf]
    %v864 = vld [vmem:[%s859 + $0x10] sm:$0xf]
    %v865 = vld [vmem:[%s859 + $0x14] sm:$0xf]
    %v866 = vld [vmem:[%s859 + $0x18] sm:$0xf]
    %v867 = vld [vmem:[%s859 + $0x1c] sm:$0xf]
    %v868 = vld [vmem:[%s859 + $0x20] sm:$0xf]
    %v869 = vld [vmem:[%s859 + $0x24] sm:$0xf]
    %v870 = vld [vmem:[%s859 + $0x28] sm:$0xf]
    %v871 = vld [vmem:[%s859 + $0x2c] sm:$0xf]
    %v872 = vld [vmem:[%s859 + $0x30] sm:$0xf]
    %v873 = vld [vmem:[%s859 + $0x34] sm:$0xf]
    %v874 = vld [vmem:[%s859 + $0x38] sm:$0xf]
    %v875 = vld [vmem:[%s859 + $0x3c] sm:$0xf]
    %v876 = vlaneseq
    %v877 = vshrl.u32 %v876, 7
    %v878 = vsub.s32 7, %v877
    %v879 = vrot.slane %v60, %v878
    %v896 = vunpack.c.l.b16 %v860
    %v897 = vunpack.c.l.b16 %v861
    %v898 = vunpack.c.l.b16 %v862
    %v899 = vunpack.c.l.b16 %v863
    %v900 = vunpack.c.l.b16 %v864
    %v901 = vunpack.c.l.b16 %v865
    %v902 = vunpack.c.l.b16 %v866
    %v903 = vunpack.c.l.b16 %v867
    %v904 = vunpack.c.l.b16 %v868
    %v905 = vunpack.c.l.b16 %v869
    %v906 = vunpack.c.l.b16 %v870
    %v907 = vunpack.c.l.b16 %v871
    %v908 = vunpack.c.l.b16 %v872
    %v909 = vunpack.c.l.b16 %v873
    %v910 = vunpack.c.l.b16 %v874
    %v911 = vunpack.c.l.b16 %v875
    %v912 = vpack.c.b16 %v897, %v896
    %v913 = vpack.c.b16 %v899, %v898
    %v914 = vpack.c.b16 %v901, %v900
    %v915 = vpack.c.b16 %v903, %v902
    %v916 = vpack.c.b16 %v905, %v904
    %v917 = vpack.c.b16 %v907, %v906
    %v918 = vpack.c.b16 %v909, %v908
    %v919 = vpack.c.b16 %v911, %v910
    %928 = vmatprep.subr.bf16.mxu0 0
    %929 = vmatpush1.bf16.msra.mxu0 %v912
    %930 = vmatprep.subr.bf16.mxu0 0
    %931 = vmatpush1.bf16.msra.mxu0 %v913
    %932 = vmatprep.subr.bf16.mxu0 0
    %933 = vmatpush1.bf16.msra.mxu0 %v914
    %934 = vmatprep.subr.bf16.mxu0 0
    %935 = vmatpush1.bf16.msra.mxu0 %v915
    %936 = vmatprep.subr.bf16.mxu0 0
    %937 = vmatpush1.bf16.msra.mxu0 %v916
    %938 = vmatprep.subr.bf16.mxu0 0
    %939 = vmatpush1.bf16.msra.mxu0 %v917
    %940 = vmatprep.subr.bf16.mxu0 0
    %941 = vmatpush1.bf16.msra.mxu0 %v918
    %942 = vmatprep.subr.bf16.mxu0 0
    %943 = vmatpush1.bf16.msra.mxu0 %v919
    %944 = vmatprep.subr.bf16.mxu0 0
    %945 = vmatpush1.bf16.msra.mxu0 0
    %946 = vmatprep.subr.bf16.mxu0 0
    %947 = vmatpush1.bf16.msra.mxu0 0
    %948 = vmatprep.subr.bf16.mxu0 0
    %949 = vmatpush1.bf16.msra.mxu0 0
    %950 = vmatprep.subr.bf16.mxu0 0
    %951 = vmatpush1.bf16.msra.mxu0 0
    %952 = vmatprep.subr.bf16.mxu0 0
    %953 = vmatpush1.bf16.msra.mxu0 0
    %954 = vmatprep.subr.bf16.mxu0 0
    %955 = vmatpush1.bf16.msra.mxu0 0
    %956 = vmatprep.subr.bf16.mxu0 0
    %957 = vmatpush1.bf16.msra.mxu0 0
    %958 = vmatprep.subr.bf16.mxu0 0
    %959 = vmatpush1.bf16.msra.mxu0 0
    %960 = vmatprep.mubr.bf16.mxu0 0
    %961 = vmatmul.mubr.bf16.gmra.mrb[0].mxu0 %v858
    %v962 = vpop.f32.mrb[0].mxu0
    %v963 = vadd.f32 %v879, %v962
    %v964 = vpop.f32.mrb[0].mxu0
    %v965 = vpop.f32.mrb[0].mxu0
    %v966 = vadd.f32 %v879, %v965
    %v967 = vpop.f32.mrb[0].mxu0
    %968 = vdwg.mxu0
    %969 = vst [vmem:[#allocation9] sm:$0xff] %v963
    %970 = vst [vmem:[#allocation9 + $0x8] sm:$0xff] %v966
    // Predicated region
    $region26: #{tpu_custom_call.1} parent=1 // pred_check
      _
    $region27: #{tpu_custom_call.1} parent=1 // pred_check_branch
      %972 = sbr.rel (0) target = $region29
    $region28: #{tpu_custom_call.1} parent=1 // pred_region
      %s974 = ssub.s32 256, 256
      %975 = vsyncadd [#allocation4], %s974
      %s976 = sshll.u32 [#allocation8], 4
      %s977 = int_to_ptr.vmem [resolvable:$true] %s976
      %982 = dma.vmem_to_hbm [thread:$0]  %s977, 256, %s3, [#allocation4], 128, 128, 8
    $region29: #{tpu_custom_call.1} parent=1 // pred_fallthru
      _
    // Predicated region
    $region30: #{tpu_custom_call.1} parent=1 // pred_check
      _
    $region31: #{tpu_custom_call.1} parent=1 // pred_check_branch
      %984 = sbr.rel (0) target = $region33
    $region32: #{tpu_custom_call.1} parent=1 // pred_region
      %s986 = ssub.s32 256, 256
      %987 = vsyncadd [#allocation10], %s986
      %s988 = sshll.u32 [#allocation9], 4
      %s989 = int_to_ptr.vmem [resolvable:$true] %s988
      %994 = dma.vmem_to_hbm [thread:$0]  %s989, 256, %s4, [#allocation10], 128, 128, 8
    $region33: #{tpu_custom_call.1} parent=1 // pred_fallthru
      _
    // Predicated region
    $region34: #{tpu_custom_call.1} parent=1 // pred_check
      _
    $region35: #{tpu_custom_call.1} parent=1 // pred_check_branch
      %996 = sbr.rel (0) target = $region37
    $region36: #{tpu_custom_call.1} parent=1 // pred_region
      %997 = dma.done [#allocation4], 256
    $region37: #{tpu_custom_call.1} parent=1 // pred_fallthru
      _
    // Predicated region
    $region38: #{tpu_custom_call.1} parent=1 // pred_check
      _
    $region39: #{tpu_custom_call.1} parent=1 // pred_check_branch
      %999 = sbr.rel (0) target = $region41
    $region40: #{tpu_custom_call.1} parent=1 // pred_region
      %1000 = dma.done [#allocation10], 256
    $region41: #{tpu_custom_call.1} parent=1 // pred_fallthru
      _
    %1001 = vsyncpa [#allocation3], 1
    %1002 = vsyncpa [#allocation6], 1
    %1003 = vsyncpa [#allocation4], 1
    %1004 = vsyncpa [#allocation10], 1

</llo_original>
